<compile_context>
chip_gen: v7x
topology: tpu7x:2x2x1
jax: 0.10.0
libtpu: 0.0.40
codegen_flags: <defaults>
</compile_context>

<pallas_src>
import functools

import jax
import jax.numpy as jnp
from jax.experimental import pallas as pl
from jax.experimental.pallas import tpu as pltpu


# --------------------------------------------------------------------------------------
# Pallas kernels
# --------------------------------------------------------------------------------------
def gemm_kernel(x_ref, w_ref, b_ref, o_ref, *, relu):
    """o = relu(x @ w + b). x:(tm,Kp) bf16, w:(Kp,N) bf16, b:(1,N) f32, o:(tm,N)."""
    acc = jnp.dot(x_ref[...], w_ref[...], preferred_element_type=jnp.float32)
    acc = acc + b_ref[...]
    if relu:
        acc = jnp.maximum(acc, 0.0)
    o_ref[...] = acc.astype(o_ref.dtype)


def inorm_stats_kernel(x_ref, o_ref):
    """Accumulate [sum, sum_sq] of one volume chunk into lanes 0/1 of a (1,1,128) block."""
    x = x_ref[...]
    s = jnp.sum(x)
    ss = jnp.sum(x * x)
    lane = jax.lax.broadcasted_iota(jnp.int32, (1, 1, 128), 2)
    v = jnp.where(lane == 0, s, 0.0) + jnp.where(lane == 1, ss, 0.0)

    @pl.when(pl.program_id(1) == 0)
    def _():
        o_ref[...] = jnp.zeros_like(o_ref)

    o_ref[...] += v


def inorm_apply_kernel(mean_ref, inv_ref, g_ref, b_ref, x_ref, o_ref):
    """Normalize + affine one volume chunk.  mean/inv per sample live in SMEM."""
    s = pl.program_id(0)
    scale = inv_ref[s] * g_ref[0]
    shift = b_ref[0] - mean_ref[s] * scale
    o_ref[...] = (x_ref[...] * scale + shift).astype(o_ref.dtype)


# --------------------------------------------------------------------------------------
# Pallas wrappers
# --------------------------------------------------------------------------------------
def _ceil_to(v, m):
    return ((v + m - 1) // m) * m


_VMEM_LIMIT = 32 * 1024 * 1024          # set explicitly: v5e scoped default is only 16 MiB


def _choose_tm(Mp, Kp, N, o_bytes, vmem_budget=20 * 1024 * 1024):
    """Largest M tile that divides Mp and keeps double-buffered VMEM under budget.
    Prefers >= 2 grid steps so both v7x TensorCores get work on the parallel M axis."""
    candidates = (4096, 2048, 1024, 512, 256, 128, 64, 32, 16)

    def est(tm):
        return 2 * (tm * Kp * 2 + tm * N * o_bytes) + 2 * (Kp * N * 2 + N * 4)

    for require_two_steps in (True, False):
        for tm in candidates:
            if Mp % tm:
                continue
            if require_two_steps and Mp // tm < 2:
                continue
            if est(tm) <= vmem_budget:
                return tm
    return 16


def pallas_gemm(x, w, b, relu=True, out_dtype=jnp.bfloat16):
    """x:(M,K), w:(K,N), b:(N,) -> (M,N) out_dtype.

    K padded only to a multiple of 16 (bf16 sublane packing); N left unpadded
    (full-extent lane block, masked stores for tiny Cout).  Operands cast to bf16
    (f32 MXU accumulation); tiled over M with the weight block resident.
    """
    M, K = x.shape
    N = w.shape[1]
    Kp = _ceil_to(K, 16)
    Mp = _ceil_to(M, 16)

    xp = x.astype(jnp.bfloat16)
    if (Mp, Kp) != (M, K):
        xp = jnp.pad(xp, ((0, Mp - M), (0, Kp - K)))
    wp = jnp.pad(w, ((0, Kp - K), (0, 0))).astype(jnp.bfloat16)
    bp = b.reshape(1, N).astype(jnp.float32)

    tm = _choose_tm(Mp, Kp, N, jnp.dtype(out_dtype).itemsize)
    out = pl.pallas_call(
        functools.partial(gemm_kernel, relu=relu),
        out_shape=jax.ShapeDtypeStruct((Mp, N), out_dtype),
        grid=(Mp // tm,),
        in_specs=[
            pl.BlockSpec((tm, Kp), lambda i: (i, 0)),
            pl.BlockSpec((Kp, N), lambda i: (0, 0)),
            pl.BlockSpec((1, N), lambda i: (0, 0)),
        ],
        out_specs=pl.BlockSpec((tm, N), lambda i: (i, 0)),
        compiler_params=pltpu.CompilerParams(
            dimension_semantics=("parallel",),
            vmem_limit_bytes=_VMEM_LIMIT),
    )(xp, wp, bp)

    if Mp != M:
        out = out[:M]
    return out


def _choose_chunk(vol8, cap=8192):
    if vol8 <= cap:
        return vol8                      # full extent block (legal even if not %128)
    c = cap - cap % 128
    while c >= 128:
        if vol8 % c == 0:
            return c
        c -= 128
    return vol8


def pallas_instance_norm_cl(x, gamma, beta, eps=1e-5, out_dtype=jnp.bfloat16):
    """x:(B, D, H, W, 1) channels-last; per-(sample,channel) normalization + affine.

    Two-pass tiled reduction: (1) chunked sum/sum-sq accumulation, (2) normalize pass.
    No full-volume VMEM block, so it also fits v7x's 64 MiB VMEM at real volume sizes.
    """
    B, D, H, W, C = x.shape
    assert C == 1
    vol = D * H * W
    assert vol % 8 == 0
    vol8 = vol // 8
    NS = B * C
    xf = x.reshape(NS, 8, vol8).astype(jnp.float32)

    ck = _choose_chunk(vol8)
    n_chunks = vol8 // ck

    stats = pl.pallas_call(
        inorm_stats_kernel,
        out_shape=jax.ShapeDtypeStruct((NS, 1, 128), jnp.float32),
        grid=(NS, n_chunks),
        in_specs=[pl.BlockSpec((1, 8, ck), lambda s, k: (s, 0, k))],
        out_specs=pl.BlockSpec((1, 1, 128), lambda s, k: (s, 0, 0)),
        compiler_params=pltpu.CompilerParams(
            dimension_semantics=("parallel", "arbitrary")),
    )(xf)

    ssum = stats[:, 0, 0]
    ssq = stats[:, 0, 1]
    mean = ssum / vol
    var = ssq / vol - mean * mean                  # biased variance (PyTorch InstanceNorm)
    inv = jax.lax.rsqrt(var + eps)

    out = pl.pallas_call(
        inorm_apply_kernel,
        out_shape=jax.ShapeDtypeStruct((NS, 8, vol8), out_dtype),
        grid=(NS, n_chunks),
        in_specs=[
            pl.BlockSpec(memory_space=pltpu.MemorySpace.SMEM),   # mean (NS,)
            pl.BlockSpec(memory_space=pltpu.MemorySpace.SMEM),   # inv  (NS,)
            pl.BlockSpec(memory_space=pltpu.MemorySpace.SMEM),   # gamma (1,)
            pl.BlockSpec(memory_space=pltpu.MemorySpace.SMEM),   # beta  (1,)
            pl.BlockSpec((1, 8, ck), lambda s, k: (s, 0, k)),
        ],
        out_specs=pl.BlockSpec((1, 8, ck), lambda s, k: (s, 0, k)),
        compiler_params=pltpu.CompilerParams(
            dimension_semantics=("parallel", "parallel")),
    )(mean, inv, gamma.astype(jnp.float32), beta.astype(jnp.float32), xf)

    return out.reshape(B, D, H, W, C)


# --------------------------------------------------------------------------------------
# Conv helpers (channels-last; im2col glue in JAX, GEMM in Pallas)
# --------------------------------------------------------------------------------------
def conv3d_relu_cl(x, w, b, relu=True, out_dtype=jnp.bfloat16):
    """3x3x3 conv, stride 1, padding 1, channels-last.
    x:(B,D,H,W,Cin) bf16, w:(Cout,Cin,3,3,3) PyTorch layout, b:(Cout,)."""
    # TODO(synk): move im2col in-kernel (halo'd DMA + 27 accumulated small matmuls) and fuse
    #             DoubleConv's conv1+conv2 with the tiny intermediate held in VMEM scratch.
    B, D, H, W, Cin = x.shape
    Cout = w.shape[0]
    xp = jnp.pad(x, ((0, 0), (1, 1), (1, 1), (1, 1), (0, 0)))
    patches = []
    for kd in range(3):
        for kh in range(3):
            for kw in range(3):
                patches.append(xp[:, kd:kd + D, kh:kh + H, kw:kw + W, :])
    pstack = jnp.stack(patches, axis=-1)                       # (B,D,H,W,Cin,27) bf16
    X = pstack.reshape(B * D * H * W, Cin * 27)
    Wm = w.reshape(Cout, Cin * 27).T                           # (Cin*27, Cout) — same ordering
    Y = pallas_gemm(X, Wm, b, relu=relu, out_dtype=out_dtype)
    return Y.reshape(B, D, H, W, Cout)


def avg_pool3d_2_cl(x):
    B, D, H, W, C = x.shape
    xr = x.reshape(B, D // 2, 2, H // 2, 2, W // 2, 2, C)
    return jnp.mean(xr, axis=(2, 4, 6), dtype=jnp.float32).astype(x.dtype)


def patch_embed_fused_cl(x, patch, w_fused, b_fused):
    """Non-overlapping patch embedding fused with the following 1x1 Conv3dReLU head.
    x:(B,D,H,W,1) bf16 -> (B, D/p, H/p, W/p, Cout) channels-last bf16."""
    # TODO(synk): gather the p^3 patch bricks via a BlockSpec index_map / in-kernel DMA instead
    #             of the XLA reshape+transpose (one strided full-volume copy today).
    B, D, H, W, C = x.shape
    p = patch
    xr = x.reshape(B, D // p, p, H // p, p, W // p, p, C)
    xr = jnp.transpose(xr, (0, 1, 3, 5, 7, 2, 4, 6))           # (B,D/p,H/p,W/p,C,p,p,p)
    X = xr.reshape(B * (D // p) * (H // p) * (W // p), C * p ** 3)
    Cout = w_fused.shape[1]
    Y = pallas_gemm(X, w_fused, b_fused, relu=True, out_dtype=jnp.bfloat16)
    return Y.reshape(B, D // p, H // p, W // p, Cout)


# --------------------------------------------------------------------------------------
# Model: Feature2VFA + simplified TransVFA forward
# --------------------------------------------------------------------------------------
def init_params(key, vfa_channels=(8, 16, 32, 64), embed_dim=32):
    ks = jax.random.split(key, 16)
    f32 = jnp.float32

    def nrm(k, shape, scale=0.1):
        return (scale * jax.random.normal(k, shape)).astype(f32)

    c0, c1, c2, c3 = vfa_channels
    p = {
        # InstanceNorm3d(1, affine=True): weight=1, bias=0 (PyTorch default init)
        "in_gamma": jnp.ones((1,), f32),
        "in_beta": jnp.zeros((1,), f32),
        # DoubleConv3d c1: 1 -> c0//4 -> c0    (TODO(synk): inner norm of DoubleConv3d omitted)
        "c1_w1": nrm(ks[0], (c0 // 4, 1, 3, 3, 3)), "c1_b1": jnp.zeros((c0 // 4,), f32),
        "c1_w2": nrm(ks[1], (c0, c0 // 4, 3, 3, 3)), "c1_b2": jnp.zeros((c0,), f32),
        # DoubleConv3d c2: 1 -> c1//4 -> c1
        "c2_w1": nrm(ks[2], (c1 // 4, 1, 3, 3, 3)), "c2_b1": jnp.zeros((c1 // 4,), f32),
        "c2_w2": nrm(ks[3], (c1, c1 // 4, 3, 3, 3)), "c2_b2": jnp.zeros((c1,), f32),
        # stand-in "Swin" patch embeddings: patch 4 -> embed_dim, patch 8 -> 2*embed_dim
        "pe4_w": nrm(ks[4], (4 ** 3, embed_dim)), "pe4_b": jnp.zeros((embed_dim,), f32),
        "pe8_w": nrm(ks[5], (8 ** 3, 2 * embed_dim)), "pe8_b": jnp.zeros((2 * embed_dim,), f32),
        # Conv3dReLU heads (1x1x1): embed_dim -> c2, 2*embed_dim -> c3
        "cs0_w": nrm(ks[6], (c2, embed_dim)), "cs0_b": jnp.zeros((c2,), f32),
        "cs1_w": nrm(ks[7], (c3, 2 * embed_dim)), "cs1_b": jnp.zeros((c3,), f32),
        # simplified decoder flow head: concat(F[-1], M[-1]) (2*c3) -> 3
        "flow_w": nrm(ks[8], (3, 2 * c3), scale=0.01), "flow_b": jnp.zeros((3,), f32),
    }
    return p


def feature2vfa_forward_cl(xcl, p):
    """xcl: (B, D, H, W, 1) channels-last f32 -> list of 4 channels-last feature pyramids."""
    x = pallas_instance_norm_cl(xcl, p["in_gamma"], p["in_beta"])    # bf16 activations
    # c1 on full resolution
    h = conv3d_relu_cl(x, p["c1_w1"], p["c1_b1"])
    f0 = conv3d_relu_cl(h, p["c1_w2"], p["c1_b2"])
    # c2 on avg_pool3d(x, 2)
    x2 = avg_pool3d_2_cl(x)
    h = conv3d_relu_cl(x2, p["c2_w1"], p["c2_b1"])
    f1 = conv3d_relu_cl(h, p["c2_w2"], p["c2_b2"])
    # Stand-in patch-embed fused with the Conv3dReLU 1x1 heads.  There is no nonlinearity
    # between the two linear maps, so relu((X @ Wpe + bpe) @ Wcs.T + bcs)
    # == relu(X @ (Wpe @ Wcs.T) + (bpe @ Wcs.T + bcs)): the fusion is exact.
    w4 = p["pe4_w"] @ p["cs0_w"].T
    b4 = p["pe4_b"] @ p["cs0_w"].T + p["cs0_b"]
    f2 = patch_embed_fused_cl(x, 4, w4, b4)                    # (B, D/4,H/4,W/4, c2)
    w8 = p["pe8_w"] @ p["cs1_w"].T
    b8 = p["pe8_b"] @ p["cs1_w"].T + p["cs1_b"]
    f3 = patch_embed_fused_cl(x, 8, w8, b8)                    # (B, D/8,H/8,W/8, c3)
    return [f0, f1, f2, f3]


def transvfa_forward(mov, fix, p):
    """Returns displacement flow (B, 3, D, H, W) — the `grid_to_flow(composed_grids[-1])` branch."""
    B, _, D, H, W = mov.shape
    # Run fix and mov through one forward pass (single set of pallas_call launches,
    # each weight block DMA'd once).
    x = jnp.concatenate([fix, mov], axis=0)                     # (2B, 1, D, H, W)
    xcl = jnp.transpose(x, (0, 2, 3, 4, 1))                     # channels-last once at boundary
    feats = feature2vfa_forward_cl(xcl, p)
    f3 = feats[-1]                                              # (2B, D/8, H/8, W/8, c3) bf16
    F3, M3 = f3[:B], f3[B:]
    coarse = jnp.concatenate([F3, M3], axis=-1)                 # (B, D/8, H/8, W/8, 2*c3)
    Bc, d, h, w, C2 = coarse.shape
    X = coarse.reshape(Bc * d * h * w, C2)
    flow_flat = pallas_gemm(X, p["flow_w"].T, p["flow_b"], relu=False,
                            out_dtype=jnp.float32)              # (M, 3), unpadded N
    flow_c = jnp.transpose(flow_flat.reshape(Bc, d, h, w, 3), (0, 4, 1, 2, 3))
    flow = jax.image.resize(flow_c, (Bc, 3, D, H, W), method="trilinear")
    return flow


# --------------------------------------------------------------------------------------
if __name__ == "__main__":
    key = jax.random.PRNGKey(0)
    k_mov, k_fix, k_par = jax.random.split(key, 3)

    B, C, D, H, W = 2, 1, 16, 16, 16                            # img_size = (16,16,16)
    mov = jax.random.normal(k_mov, (B, C, D, H, W), dtype=jnp.float32)
    fix = jax.random.normal(k_fix, (B, C, D, H, W), dtype=jnp.float32)

    params = init_params(k_par, vfa_channels=(8, 16, 32, 64), embed_dim=32)

    flow = jax.jit(transvfa_forward)(mov, fix, params)
    flow = jax.block_until_ready(flow)

    assert flow.shape == (B, 3, D, H, W), flow.shape
    assert jnp.all(jnp.isfinite(flow))
    print("KERNEL_OK")
</pallas_src>

<mosaic_0001>
module attributes {stable_mosaic.version = 11 : i64} {
  func.func @inorm_stats_kernel(%arg0: i32, %arg1: i32, %arg2: memref<1x8x512xf32, #tpu.memory_space<vmem>>, %arg3: memref<1x1x128xf32, #tpu.memory_space<vmem>>) attributes {dimension_semantics = [#tpu.dimension_semantics<parallel>, #tpu.dimension_semantics<arbitrary>], iteration_bounds = array<i64: 4, 1>, scalar_prefetch = 0 : i64, scratch_operands = 0 : i64, tpu.core_type = #tpu.core_type<tc>, window_params = [{transform_indices = @transform_0, window_bounds = array<i64: 1, 8, 512>}, {transform_indices = @transform_1, window_bounds = array<i64: 1, 1, 128>}]} {
    %c0 = arith.constant 0 : index
    %c0_0 = arith.constant 0 : index
    %c0_1 = arith.constant 0 : index
    %0 = vector.load %arg2[%c0, %c0_0, %c0_1] : memref<1x8x512xf32, #tpu.memory_space<vmem>>, vector<1x8x512xf32>
    %1 = vector.shape_cast %0 : vector<1x8x512xf32> to vector<1x1x8x512xf32>
    %cst = arith.constant dense<0.000000e+00> : vector<1xf32>
    %2 = vector.multi_reduction <add>, %1, %cst [1, 2, 3] : vector<1x1x8x512xf32> to vector<1xf32>
    %3 = vector.shape_cast %2 : vector<1xf32> to vector<1x1x1x1xf32>
    %4 = vector.extract %3[0, 0, 0, 0] : f32 from vector<1x1x1x1xf32>
    %5 = arith.mulf %0, %0 : vector<1x8x512xf32>
    %6 = vector.shape_cast %5 : vector<1x8x512xf32> to vector<1x1x8x512xf32>
    %cst_2 = arith.constant dense<0.000000e+00> : vector<1xf32>
    %7 = vector.multi_reduction <add>, %6, %cst_2 [1, 2, 3] : vector<1x1x8x512xf32> to vector<1xf32>
    %8 = vector.shape_cast %7 : vector<1xf32> to vector<1x1x1x1xf32>
    %9 = vector.extract %8[0, 0, 0, 0] : f32 from vector<1x1x1x1xf32>
    %10 = tpu.iota {dimensions = array<i32: 2>} : vector<1x1x128xi32>
    %c0_i32 = arith.constant 0 : i32
    %11 = vector.broadcast %c0_i32 : i32 to vector<1x1x128xi32>
    %12 = arith.cmpi eq, %10, %11 : vector<1x1x128xi32>
    %cst_3 = arith.constant 0.000000e+00 : f32
    %13 = vector.broadcast %4 : f32 to vector<1x1x128xf32>
    %14 = vector.broadcast %cst_3 : f32 to vector<1x1x128xf32>
    %15 = arith.select %12, %13, %14 : vector<1x1x128xi1>, vector<1x1x128xf32>
    %c1_i32 = arith.constant 1 : i32
    %16 = vector.broadcast %c1_i32 : i32 to vector<1x1x128xi32>
    %17 = arith.cmpi eq, %10, %16 : vector<1x1x128xi32>
    %cst_4 = arith.constant 0.000000e+00 : f32
    %18 = vector.broadcast %9 : f32 to vector<1x1x128xf32>
    %19 = vector.broadcast %cst_4 : f32 to vector<1x1x128xf32>
    %20 = arith.select %17, %18, %19 : vector<1x1x128xi1>, vector<1x1x128xf32>
    %21 = arith.addf %15, %20 : vector<1x1x128xf32>
    %c0_i32_5 = arith.constant 0 : i32
    %22 = arith.cmpi eq, %arg1, %c0_i32_5 : i32
    %23 = arith.extui %22 : i1 to i32
    %c0_i32_6 = arith.constant 0 : i32
    %24 = arith.cmpi ne, %23, %c0_i32_6 : i32
    scf.if %24 {
      %cst_13 = arith.constant 0.000000e+00 : f32
      %28 = vector.broadcast %cst_13 : f32 to vector<1x1x128xf32>
      %c0_14 = arith.constant 0 : index
      %c0_15 = arith.constant 0 : index
      %c0_16 = arith.constant 0 : index
      %29 = vector.load %arg3[%c0_14, %c0_15, %c0_16] : memref<1x1x128xf32, #tpu.memory_space<vmem>>, vector<1x1x128xf32>
      tpu.vector_store %arg3[%c0_14, %c0_15, %c0_16], %28 {strides = array<i32>} : memref<1x1x128xf32, #tpu.memory_space<vmem>>, vector<1x1x128xf32>,
    } else {
    }
    %c0_7 = arith.constant 0 : index
    %c0_8 = arith.constant 0 : index
    %c0_9 = arith.constant 0 : index
    %25 = vector.load %arg3[%c0_7, %c0_8, %c0_9] : memref<1x1x128xf32, #tpu.memory_space<vmem>>, vector<1x1x128xf32>
    %26 = arith.addf %25, %21 : vector<1x1x128xf32>
    %c0_10 = arith.constant 0 : index
    %c0_11 = arith.constant 0 : index
    %c0_12 = arith.constant 0 : index
    %27 = vector.load %arg3[%c0_10, %c0_11, %c0_12] : memref<1x1x128xf32, #tpu.memory_space<vmem>>, vector<1x1x128xf32>
    tpu.vector_store %arg3[%c0_10, %c0_11, %c0_12], %26 {strides = array<i32>} : memref<1x1x128xf32, #tpu.memory_space<vmem>>, vector<1x1x128xf32>,
    return
  }
  func.func @transform_0(%arg0: i32, %arg1: i32) -> (i32, i32, i32) {
    %c0_i32 = arith.constant 0 : i32
    %c0_i32_0 = arith.constant 0 : i32
    return %arg0, %c0_i32, %arg1 : i32, i32, i32
  }
  func.func @transform_1(%arg0: i32, %arg1: i32) -> (i32, i32, i32) {
    %c0_i32 = arith.constant 0 : i32
    %c0_i32_0 = arith.constant 0 : i32
    %c0_i32_1 = arith.constant 0 : i32
    return %arg0, %c0_i32, %c0_i32_0 : i32, i32, i32
  }
}

module attributes {stable_mosaic.version = 11 : i64} {
  func.func @inorm_apply_kernel(%arg0: i32, %arg1: i32, %arg2: memref<4xf32, #tpu.memory_space<smem>>, %arg3: memref<4xf32, #tpu.memory_space<smem>>, %arg4: memref<1xf32, #tpu.memory_space<smem>>, %arg5: memref<1xf32, #tpu.memory_space<smem>>, %arg6: memref<1x8x512xf32, #tpu.memory_space<vmem>>, %arg7: memref<1x8x512xbf16, #tpu.memory_space<vmem>>) attributes {dimension_semantics = [#tpu.dimension_semantics<parallel>, #tpu.dimension_semantics<parallel>], iteration_bounds = array<i64: 4, 1>, scalar_prefetch = 0 : i64, scratch_operands = 0 : i64, tpu.core_type = #tpu.core_type<tc>, window_params = [{transform_indices = @transform_0, window_bounds = array<i64: 4>}, {transform_indices = @transform_1, window_bounds = array<i64: 4>}, {transform_indices = @transform_2, window_bounds = array<i64: 1>}, {transform_indices = @transform_3, window_bounds = array<i64: 1>}, {transform_indices = @transform_4, window_bounds = array<i64: 1, 8, 512>}, {transform_indices = @transform_5, window_bounds = array<i64: 1, 8, 512>}]} {
    %0 = arith.index_cast %arg0 : i32 to index
    %1 = memref.load %arg3[%0] : memref<4xf32, #tpu.memory_space<smem>>
    %c0 = arith.constant 0 : index
    %2 = memref.load %arg4[%c0] : memref<1xf32, #tpu.memory_space<smem>>
    %3 = arith.mulf %1, %2 : f32
    %c0_0 = arith.constant 0 : index
    %4 = memref.load %arg5[%c0_0] : memref<1xf32, #tpu.memory_space<smem>>
    %5 = arith.index_cast %arg0 : i32 to index
    %6 = memref.load %arg2[%5] : memref<4xf32, #tpu.memory_space<smem>>
    %7 = arith.mulf %6, %3 : f32
    %8 = arith.subf %4, %7 : f32
    %c0_1 = arith.constant 0 : index
    %c0_2 = arith.constant 0 : index
    %c0_3 = arith.constant 0 : index
    %9 = vector.load %arg6[%c0_1, %c0_2, %c0_3] : memref<1x8x512xf32, #tpu.memory_space<vmem>>, vector<1x8x512xf32>
    %10 = vector.broadcast %3 : f32 to vector<1x8x512xf32>
    %11 = arith.mulf %9, %10 : vector<1x8x512xf32>
    %12 = vector.broadcast %8 : f32 to vector<1x8x512xf32>
    %13 = arith.addf %11, %12 : vector<1x8x512xf32>
    %14 = arith.truncf %13 : vector<1x8x512xf32> to vector<1x8x512xbf16>
    %c0_4 = arith.constant 0 : index
    %c0_5 = arith.constant 0 : index
    %c0_6 = arith.constant 0 : index
    %15 = vector.load %arg7[%c0_4, %c0_5, %c0_6] : memref<1x8x512xbf16, #tpu.memory_space<vmem>>, vector<1x8x512xbf16>
    tpu.vector_store %arg7[%c0_4, %c0_5, %c0_6], %14 {strides = array<i32>} : memref<1x8x512xbf16, #tpu.memory_space<vmem>>, vector<1x8x512xbf16>,
    return
  }
  func.func @transform_0(%arg0: i32, %arg1: i32) -> i32 {
    %c0_i32 = arith.constant 0 : i32
    %c0_i32_0 = arith.constant 0 : i32
    return %c0_i32 : i32
  }
  func.func @transform_1(%arg0: i32, %arg1: i32) -> i32 {
    %c0_i32 = arith.constant 0 : i32
    %c0_i32_0 = arith.constant 0 : i32
    return %c0_i32 : i32
  }
  func.func @transform_2(%arg0: i32, %arg1: i32) -> i32 {
    %c0_i32 = arith.constant 0 : i32
    %c0_i32_0 = arith.constant 0 : i32
    return %c0_i32 : i32
  }
  func.func @transform_3(%arg0: i32, %arg1: i32) -> i32 {
    %c0_i32 = arith.constant 0 : i32
    %c0_i32_0 = arith.constant 0 : i32
    return %c0_i32 : i32
  }
  func.func @transform_4(%arg0: i32, %arg1: i32) -> (i32, i32, i32) {
    %c0_i32 = arith.constant 0 : i32
    %c0_i32_0 = arith.constant 0 : i32
    return %arg0, %c0_i32, %arg1 : i32, i32, i32
  }
  func.func @transform_5(%arg0: i32, %arg1: i32) -> (i32, i32, i32) {
    %c0_i32 = arith.constant 0 : i32
    %c0_i32_0 = arith.constant 0 : i32
    return %arg0, %c0_i32, %arg1 : i32, i32, i32
  }
}

module attributes {stable_mosaic.version = 11 : i64} {
  func.func @gemm_kernel(%arg0: i32, %arg1: memref<16x512xbf16, #tpu.memory_space<vmem>>, %arg2: memref<512x64xbf16, #tpu.memory_space<vmem>>, %arg3: memref<1x64xf32, #tpu.memory_space<vmem>>, %arg4: memref<16x64xbf16, #tpu.memory_space<vmem>>) attributes {dimension_semantics = [#tpu.dimension_semantics<parallel>], iteration_bounds = array<i64: 2>, scalar_prefetch = 0 : i64, scratch_operands = 0 : i64, tpu.core_type = #tpu.core_type<tc>, window_params = [{transform_indices = @transform_0, window_bounds = array<i64: 16, 512>}, {pipeline_mode = #tpu.pipeline_mode<synchronous>, transform_indices = @transform_1, window_bounds = array<i64: 512, 64>}, {pipeline_mode = #tpu.pipeline_mode<synchronous>, transform_indices = @transform_2, window_bounds = array<i64: 1, 64>}, {transform_indices = @transform_3, window_bounds = array<i64: 16, 64>}]} {
    %c0 = arith.constant 0 : index
    %c0_0 = arith.constant 0 : index
    %0 = vector.load %arg1[%c0, %c0_0] : memref<16x512xbf16, #tpu.memory_space<vmem>>, vector<16x512xbf16>
    %c0_1 = arith.constant 0 : index
    %c0_2 = arith.constant 0 : index
    %1 = vector.load %arg2[%c0_1, %c0_2] : memref<512x64xbf16, #tpu.memory_space<vmem>>, vector<512x64xbf16>
    %cst = arith.constant dense<0.000000e+00> : vector<16x64xf32>
    %2 = tpu.matmul %0, %1, %cst {dimension_numbers = #tpu.dot_dimension_numbers<[1], [0], [0], [1], [0, 0, 1, 1], [], []>} : vector<16x512xbf16>, vector<512x64xbf16>, vector<16x64xf32> -> vector<16x64xf32>
    %c0_3 = arith.constant 0 : index
    %c0_4 = arith.constant 0 : index
    %3 = vector.load %arg3[%c0_3, %c0_4] : memref<1x64xf32, #tpu.memory_space<vmem>>, vector<1x64xf32>
    %4 = vector.broadcast %3 : vector<1x64xf32> to vector<16x64xf32>
    %5 = arith.addf %2, %4 : vector<16x64xf32>
    %cst_5 = arith.constant 0.000000e+00 : f32
    %6 = vector.broadcast %cst_5 : f32 to vector<16x64xf32>
    %7 = arith.maximumf %5, %6 : vector<16x64xf32>
    %8 = arith.truncf %7 : vector<16x64xf32> to vector<16x64xbf16>
    %c0_6 = arith.constant 0 : index
    %c0_7 = arith.constant 0 : index
    %9 = vector.load %arg4[%c0_6, %c0_7] : memref<16x64xbf16, #tpu.memory_space<vmem>>, vector<16x64xbf16>
    tpu.vector_store %arg4[%c0_6, %c0_7], %8 {strides = array<i32>} : memref<16x64xbf16, #tpu.memory_space<vmem>>, vector<16x64xbf16>,
    return
  }
  func.func @transform_0(%arg0: i32) -> (i32, i32) {
    %c0_i32 = arith.constant 0 : i32
    %c0_i32_0 = arith.constant 0 : i32
    return %arg0, %c0_i32 : i32, i32
  }
  func.func @transform_1(%arg0: i32) -> (i32, i32) {
    %c0_i32 = arith.constant 0 : i32
    %c0_i32_0 = arith.constant 0 : i32
    %c0_i32_1 = arith.constant 0 : i32
    return %c0_i32, %c0_i32_0 : i32, i32
  }
  func.func @transform_2(%arg0: i32) -> (i32, i32) {
    %c0_i32 = arith.constant 0 : i32
    %c0_i32_0 = arith.constant 0 : i32
    %c0_i32_1 = arith.constant 0 : i32
    return %c0_i32, %c0_i32_0 : i32, i32
  }
  func.func @transform_3(%arg0: i32) -> (i32, i32) {
    %c0_i32 = arith.constant 0 : i32
    %c0_i32_0 = arith.constant 0 : i32
    return %arg0, %c0_i32 : i32, i32
  }
}

module attributes {stable_mosaic.version = 11 : i64} {
  func.func @gemm_kernel(%arg0: i32, %arg1: memref<16x128xbf16, #tpu.memory_space<vmem>>, %arg2: memref<128x3xbf16, #tpu.memory_space<vmem>>, %arg3: memref<1x3xf32, #tpu.memory_space<vmem>>, %arg4: memref<16x3xf32, #tpu.memory_space<vmem>>) attributes {dimension_semantics = [#tpu.dimension_semantics<parallel>], iteration_bounds = array<i64: 1>, scalar_prefetch = 0 : i64, scratch_operands = 0 : i64, tpu.core_type = #tpu.core_type<tc>, window_params = [{transform_indices = @transform_0, window_bounds = array<i64: 16, 128>}, {pipeline_mode = #tpu.pipeline_mode<synchronous>, transform_indices = @transform_1, window_bounds = array<i64: 128, 3>}, {pipeline_mode = #tpu.pipeline_mode<synchronous>, transform_indices = @transform_2, window_bounds = array<i64: 1, 3>}, {transform_indices = @transform_3, window_bounds = array<i64: 16, 3>}]} {
    %c0 = arith.constant 0 : index
    %c0_0 = arith.constant 0 : index
    %0 = vector.load %arg1[%c0, %c0_0] : memref<16x128xbf16, #tpu.memory_space<vmem>>, vector<16x128xbf16>
    %c0_1 = arith.constant 0 : index
    %c0_2 = arith.constant 0 : index
    %1 = vector.load %arg2[%c0_1, %c0_2] : memref<128x3xbf16, #tpu.memory_space<vmem>>, vector<128x3xbf16>
    %cst = arith.constant dense<0.000000e+00> : vector<16x3xf32>
    %2 = tpu.matmul %0, %1, %cst {dimension_numbers = #tpu.dot_dimension_numbers<[1], [0], [0], [1], [0, 0, 1, 1], [], []>} : vector<16x128xbf16>, vector<128x3xbf16>, vector<16x3xf32> -> vector<16x3xf32>
    %c0_3 = arith.constant 0 : index
    %c0_4 = arith.constant 0 : index
    %3 = vector.load %arg3[%c0_3, %c0_4] : memref<1x3xf32, #tpu.memory_space<vmem>>, vector<1x3xf32>
    %4 = vector.broadcast %3 : vector<1x3xf32> to vector<16x3xf32>
    %5 = arith.addf %2, %4 : vector<16x3xf32>
    %c0_5 = arith.constant 0 : index
    %c0_6 = arith.constant 0 : index
    %6 = vector.load %arg4[%c0_5, %c0_6] : memref<16x3xf32, #tpu.memory_space<vmem>>, vector<16x3xf32>
    tpu.vector_store %arg4[%c0_5, %c0_6], %5 {strides = array<i32>} : memref<16x3xf32, #tpu.memory_space<vmem>>, vector<16x3xf32>,
    return
  }
  func.func @transform_0(%arg0: i32) -> (i32, i32) {
    %c0_i32 = arith.constant 0 : i32
    %c0_i32_0 = arith.constant 0 : i32
    return %arg0, %c0_i32 : i32, i32
  }
  func.func @transform_1(%arg0: i32) -> (i32, i32) {
    %c0_i32 = arith.constant 0 : i32
    %c0_i32_0 = arith.constant 0 : i32
    %c0_i32_1 = arith.constant 0 : i32
    return %c0_i32, %c0_i32_0 : i32, i32
  }
  func.func @transform_2(%arg0: i32) -> (i32, i32) {
    %c0_i32 = arith.constant 0 : i32
    %c0_i32_0 = arith.constant 0 : i32
    %c0_i32_1 = arith.constant 0 : i32
    return %c0_i32, %c0_i32_0 : i32, i32
  }
  func.func @transform_3(%arg0: i32) -> (i32, i32) {
    %c0_i32 = arith.constant 0 : i32
    %c0_i32_0 = arith.constant 0 : i32
    return %arg0, %c0_i32 : i32, i32
  }
}

</mosaic_0001>

<llo_original>
// kernel: transvfa_forward.5
$region0: #{transvfa_forward.5}
  #allocation0 [shape = 'u32[]', space=smem, size = 0x4, offset = 0x4, fixed_abs, tag = 'smem constant byte address 0x4 - core index']
  #allocation1 [shape = 'u32[144,128]{1,0:T(1,128)}', space=vmem, size = 0x12000, scoped, tag = 'internal scratch']
  #allocation2 [shape = 'f32[1]{0:T(128)S(6)}', space=smem, size = 0x200, scoped, tag = 'scoped memory for transvfa_forward.5']
  #allocation3 [shape = 'f32[1]{0:T(128)S(6)}', space=smem, size = 0x200, scoped, tag = 'scoped memory for transvfa_forward.5']
  %s0 = inlined_call_operand.vmem [shape: f32[4], index: 0, kind: input, shape index: {}]
  %s1 = inlined_call_operand.vmem [shape: f32[4], index: 1, kind: input, shape index: {}]
  %s2 = inlined_call_operand.<no memory space> [shape: f32[1], index: 2, kind: input, shape index: {}]
  %s3 = inlined_call_operand.<no memory space> [shape: f32[1], index: 3, kind: input, shape index: {}]
  %s4 = inlined_call_operand.vmem [shape: f32[4,8,512], index: 4, kind: input, shape index: {}]
  %s5 = inlined_call_operand.vmem [shape: bf16[4,8,512], index: 5, kind: output, shape index: {}]
  %s6 = sld [smem:[#allocation0]]
  $region61: #{transvfa_forward.5} parent=0
    _
  %s8 = ssub.s32 1, %s6
  %s9 = scalar_select 0, %s8, %s6
  %10 = sst [smem:[#allocation2]] %s2
  %11 = sst [smem:[#allocation3]] %s3
  $region1: #{transvfa_forward.5} parent=0
    #allocation4 [shape = 'u8[512]{0}', space=smem, size = 0x200, scoped, tag = 'input window, operand 0, single buffered']
    #allocation5 [shape = 's32[2]{0}', space=sflag, size = 0x8, scoped, tag = 'scoped memory for transvfa_forward.5']
    #allocation6 [shape = 'u8[512]{0}', space=smem, size = 0x200, scoped, tag = 'input window, operand 1, single buffered']
    #allocation7 [shape = 's32[1]{0}', space=sflag, size = 0x4, scoped, tag = 'scoped memory for transvfa_forward.5']
    %12 = vsyncpa [#allocation5], 0
    %13 = vsyncpa [#allocation7], 0
    loop: start=0, step=1, limit=6
    $region2: #{transvfa_forward.5} parent=1 // loop_pre_header
      _
    $region3: #{transvfa_forward.5} parent=1 // loop_header
      %s15 = sphi 0, %s19
      %p16 = scmp.ge.s32.totalorder %s15, 6
      %s22 = sphi 0, %s34
      %s23 = sphi 0, %s30
      %s24 = sphi 0, %s22
      %s25 = sphi 0, %s23
      %s26 = sphi 0, %s24
      %s27 = sphi 0, %s25
      %s35 = sphi 0, %s35
      %s37 = sphi 0, %s35
      %s38 = sphi 0, %s37
      %s52 = sphi 0, %s38
      %s56 = sphi 0, %s56
      %s58 = sphi 0, %s56
      %s59 = sphi 0, %s58
      %s73 = sphi 0, %s59
      %s77 = sphi 0, %s77
      %s79 = sphi 0, %s77
      %s80 = sphi 0, %s79
      %s94 = sphi 0, %s80
      %s98 = sphi 0, %s98
      %s100 = sphi 0, %s98
      %s101 = sphi 0, %s100
      %s115 = sphi 0, %s101
      %s123 = sphi 0, %s125
      %s126 = sphi 0, %s123
      %s127 = sphi 0, %s126
      %s143 = sphi 0, %s127
      %s151 = sphi 0, %s153
      %s154 = sphi 0, %s151
      %s155 = sphi 0, %s154
      %s171 = sphi 0, %s155
    $region4: #{transvfa_forward.5} parent=1 // loop_header_branch
      %18 = sbr.rel (%p16) target = $region8
    $region5: #{transvfa_forward.5} parent=1 // loop_body
      %s20 = ssub.s32 %s15, 1
      %s21 = ssub.s32 %s15, 2
      %s28 = sadd.s32 1, %s23
      %p29 = scmp.ge.s32.totalorder %s28, 1
      %s30 = scalar_select %p29, 0, %s28
      %s31 = sadd.s32 1, %s22
      %s32 = scalar_select %p29, %s31, %s22
      %p33 = scmp.ge.s32.totalorder %s32, 4
      %s34 = scalar_select %p33, 0, %s32
      %s36 = sadd.s32 %s35, 1
      %p39 = scmp.eq.s32.totalorder %s15, 3
      %p40 = scmp.ne.s32.totalorder %s35, %s37
      %p41 = scmp.eq.s32.totalorder %s15, 0
      %p42 = por %p40, %p41
      %p43 = scmp.ne.s32.totalorder %s35, %s37
      %p44 = scmp.eq.s32.totalorder %s20, 3
      %p45 = por %p43, %p44
      %p46 = scmp.ne.s32.totalorder %s37, %s38
      %p47 = scmp.eq.s32.totalorder %s20, 0
      %p48 = por %p46, %p47
      %p49 = scmp.ne.s32.totalorder %s37, %s38
      %p50 = scmp.eq.s32.totalorder %s21, 3
      %p51 = por %p49, %p50
      %p53 = scmp.ne.s32.totalorder %s38, %s52
      %p54 = scmp.eq.s32.totalorder %s21, 0
      %p55 = por %p53, %p54
      %s57 = sadd.s32 %s56, 1
      %p60 = scmp.eq.s32.totalorder %s15, 3
      %p61 = scmp.ne.s32.totalorder %s56, %s58
      %p62 = scmp.eq.s32.totalorder %s15, 0
      %p63 = por %p61, %p62
      %p64 = scmp.ne.s32.totalorder %s56, %s58
      %p65 = scmp.eq.s32.totalorder %s20, 3
      %p66 = por %p64, %p65
      %p67 = scmp.ne.s32.totalorder %s58, %s59
      %p68 = scmp.eq.s32.totalorder %s20, 0
      %p69 = por %p67, %p68
      %p70 = scmp.ne.s32.totalorder %s58, %s59
      %p71 = scmp.eq.s32.totalorder %s21, 3
      %p72 = por %p70, %p71
      %p74 = scmp.ne.s32.totalorder %s59, %s73
      %p75 = scmp.eq.s32.totalorder %s21, 0
      %p76 = por %p74, %p75
      %s78 = sadd.s32 %s77, 1
      %p81 = scmp.eq.s32.totalorder %s15, 3
      %p82 = scmp.ne.s32.totalorder %s77, %s79
      %p83 = scmp.eq.s32.totalorder %s15, 0
      %p84 = por %p82, %p83
      %p85 = scmp.ne.s32.totalorder %s77, %s79
      %p86 = scmp.eq.s32.totalorder %s20, 3
      %p87 = por %p85, %p86
      %p88 = scmp.ne.s32.totalorder %s79, %s80
      %p89 = scmp.eq.s32.totalorder %s20, 0
      %p90 = por %p88, %p89
      %p91 = scmp.ne.s32.totalorder %s79, %s80
      %p92 = scmp.eq.s32.totalorder %s21, 3
      %p93 = por %p91, %p92
      %p95 = scmp.ne.s32.totalorder %s80, %s94
      %p96 = scmp.eq.s32.totalorder %s21, 0
      %p97 = por %p95, %p96
      %s99 = sadd.s32 %s98, 1
      %p102 = scmp.eq.s32.totalorder %s15, 3
      %p103 = scmp.ne.s32.totalorder %s98, %s100
      %p104 = scmp.eq.s32.totalorder %s15, 0
      %p105 = por %p103, %p104
      %p106 = scmp.ne.s32.totalorder %s98, %s100
      %p107 = scmp.eq.s32.totalorder %s20, 3
      %p108 = por %p106, %p107
      %p109 = scmp.ne.s32.totalorder %s100, %s101
      %p110 = scmp.eq.s32.totalorder %s20, 0
      %p111 = por %p109, %p110
      %p112 = scmp.ne.s32.totalorder %s100, %s101
      %p113 = scmp.eq.s32.totalorder %s21, 3
      %p114 = por %p112, %p113
      %p116 = scmp.ne.s32.totalorder %s101, %s115
      %p117 = scmp.eq.s32.totalorder %s21, 0
      %p118 = por %p116, %p117
      %s119 = ssub.s32 %s22, %s34
      %s120 = ssub.s32 %s23, %s30
      %s121 = sor.u32 %s119, %s120
      %p122 = scmp.eq.s32.totalorder %s121, 0
      %s124 = sadd.s32 %s123, 1
      %s125 = scalar_select %p122, %s123, %s124
      %p128 = pneg %p122
      %p129 = scmp.eq.s32.totalorder %s15, 3
      %p130 = por %p128, %p129
      %p131 = scmp.ne.s32.totalorder %s123, %s126
      %p132 = scmp.eq.s32.totalorder %s15, 0
      %p133 = por %p131, %p132
      %p134 = scmp.ne.s32.totalorder %s123, %s126
      %p135 = scmp.eq.s32.totalorder %s20, 3
      %p136 = por %p134, %p135
      %p137 = scmp.ne.s32.totalorder %s126, %s127
      %p138 = scmp.eq.s32.totalorder %s20, 0
      %p139 = por %p137, %p138
      %p140 = scmp.ne.s32.totalorder %s126, %s127
      %p141 = scmp.eq.s32.totalorder %s21, 3
      %p142 = por %p140, %p141
      %p144 = scmp.ne.s32.totalorder %s127, %s143
      %p145 = scmp.eq.s32.totalorder %s21, 0
      %p146 = por %p144, %p145
      %s147 = ssub.s32 %s22, %s34
      %s148 = ssub.s32 %s23, %s30
      %s149 = sor.u32 %s147, %s148
      %p150 = scmp.eq.s32.totalorder %s149, 0
      %s152 = sadd.s32 %s151, 1
      %s153 = scalar_select %p150, %s151, %s152
      %p156 = pneg %p150
      %p157 = scmp.eq.s32.totalorder %s15, 3
      %p158 = por %p156, %p157
      %p159 = scmp.ne.s32.totalorder %s151, %s154
      %p160 = scmp.eq.s32.totalorder %s15, 0
      %p161 = por %p159, %p160
      %p162 = scmp.ne.s32.totalorder %s151, %s154
      %p163 = scmp.eq.s32.totalorder %s20, 3
      %p164 = por %p162, %p163
      %p165 = scmp.ne.s32.totalorder %s154, %s155
      %p166 = scmp.eq.s32.totalorder %s20, 0
      %p167 = por %p165, %p166
      %p168 = scmp.ne.s32.totalorder %s154, %s155
      %p169 = scmp.eq.s32.totalorder %s21, 3
      %p170 = por %p168, %p169
      %p172 = scmp.ne.s32.totalorder %s155, %s171
      %p173 = scmp.eq.s32.totalorder %s21, 0
      %p174 = por %p172, %p173
      %p175 = scmp.le.s32.totalorder 1, %s15
      %p176 = scmp.lt.s32.totalorder %s15, 5
      %p177 = pnand %p175, %p176
      %p178 = pneg %p177
      // Predicated region
      $region9: #{transvfa_forward.5} parent=5 // pred_check
        _
      $region10: #{transvfa_forward.5} parent=5 // pred_check_branch
        %180 = sbr.rel (%p177) target = $region12
      $region11: #{transvfa_forward.5} parent=5 // pred_region
        %s181 = ssub.s32 %s15, 1
        // Predicated region
        $region13: #{transvfa_forward.5} parent=11 // pred_check
          %p182 = pneg %p48
        $region14: #{transvfa_forward.5} parent=11 // pred_check_branch
          %184 = sbr.rel (%p182) target = $region16
        $region15: #{transvfa_forward.5} parent=11 // pred_region
          %s186 = ssub.s32 16, 16
          %187 = vsyncadd [#allocation5], %s186
          %s189 = sshll.u32 %s0, 4
          %s190 = int_to_ptr.vmem [resolvable:$true] %s189
          %192 = dma.vmem_to_smem %s190, 16, [#allocation4], [#allocation5]
        $region16: #{transvfa_forward.5} parent=11 // pred_fallthru
          _
        // Predicated region
        $region17: #{transvfa_forward.5} parent=11 // pred_check
          %p193 = pneg %p69
        $region18: #{transvfa_forward.5} parent=11 // pred_check_branch
          %195 = sbr.rel (%p193) target = $region20
        $region19: #{transvfa_forward.5} parent=11 // pred_region
          %s197 = ssub.s32 16, 16
          %198 = vsyncadd [#allocation7], %s197
          %s200 = sshll.u32 %s1, 4
          %s201 = int_to_ptr.vmem [resolvable:$true] %s200
          %203 = dma.vmem_to_smem %s201, 16, [#allocation6], [#allocation7]
        $region20: #{transvfa_forward.5} parent=11 // pred_fallthru
          _
        // Predicated region
        $region21: #{transvfa_forward.5} parent=11 // pred_check
          %p204 = pneg %p90
        $region22: #{transvfa_forward.5} parent=11 // pred_check_branch
          %206 = sbr.rel (%p204) target = $region24
        $region23: #{transvfa_forward.5} parent=11 // pred_region
          _
        $region24: #{transvfa_forward.5} parent=11 // pred_fallthru
          _
        // Predicated region
        $region25: #{transvfa_forward.5} parent=11 // pred_check
          %p207 = pneg %p111
        $region26: #{transvfa_forward.5} parent=11 // pred_check_branch
          %209 = sbr.rel (%p207) target = $region28
        $region27: #{transvfa_forward.5} parent=11 // pred_region
          _
        $region28: #{transvfa_forward.5} parent=11 // pred_fallthru
          _
      $region12: #{transvfa_forward.5} parent=5 // pred_fallthru
        _
      %p210 = scmp.lt.s32.totalorder %s15, 4
      // Predicated region
      $region29: #{transvfa_forward.5} parent=5 // pred_check
        %p211 = pneg %p210
      $region30: #{transvfa_forward.5} parent=5 // pred_check_branch
        %213 = sbr.rel (%p211) target = $region32
      $region31: #{transvfa_forward.5} parent=5 // pred_region
        // Predicated region
        $region33: #{transvfa_forward.5} parent=31 // pred_check
          %p214 = pneg %p133
        $region34: #{transvfa_forward.5} parent=31 // pred_check_branch
          %216 = sbr.rel (%p214) target = $region36
        $region35: #{transvfa_forward.5} parent=31 // pred_region
          %s217 = smul.u32 4, %s23
          %p218 = scmp.lt.s32.totalorder %s22, 3
          %s219 = scalar_select %p218, %s22, 3
          %p220 = scmp.lt.s32.totalorder %s217, 3
          %s221 = scalar_select %p220, %s217, 3
          %s222 = smul.addr %s219, 4
          %s223 = sadd.s32 %s221, %s222
          %s224 = smul.addr %s223, 8
          %s225 = scalar_lea.vmem %s4, %s224
          %s226 = smul.u32 4, %s23
        $region36: #{transvfa_forward.5} parent=31 // pred_fallthru
          _
      $region32: #{transvfa_forward.5} parent=5 // pred_fallthru
        _
      %p227 = scmp.le.s32.totalorder 1, %s15
      %p228 = scmp.lt.s32.totalorder %s15, 5
      %p229 = pnand %p227, %p228
      %p230 = pneg %p229
      // Predicated region
      $region37: #{transvfa_forward.5} parent=5 // pred_check
        _
      $region38: #{transvfa_forward.5} parent=5 // pred_check_branch
        %232 = sbr.rel (%p229) target = $region40
      $region39: #{transvfa_forward.5} parent=5 // pred_region
        %s233 = ssub.s32 %s15, 1
        // Predicated region
        $region41: #{transvfa_forward.5} parent=39 // pred_check
          %p234 = pneg %p48
        $region42: #{transvfa_forward.5} parent=39 // pred_check_branch
          %236 = sbr.rel (%p234) target = $region44
        $region43: #{transvfa_forward.5} parent=39 // pred_region
          %237 = dma.done [#allocation5], 16
        $region44: #{transvfa_forward.5} parent=39 // pred_fallthru
          _
        // Predicated region
        $region45: #{transvfa_forward.5} parent=39 // pred_check
          %p238 = pneg %p69
        $region46: #{transvfa_forward.5} parent=39 // pred_check_branch
          %240 = sbr.rel (%p238) target = $region48
        $region47: #{transvfa_forward.5} parent=39 // pred_region
          %241 = dma.done [#allocation7], 16
        $region48: #{transvfa_forward.5} parent=39 // pred_fallthru
          _
        %242 = sfence
        %p243 = pneg %p48
        %p244 = pneg %p45
        %p245 = pneg %p69
        %p246 = pneg %p66
        %p247 = pneg %p90
        %p248 = pneg %p87
        %p249 = pneg %p111
        %p250 = pneg %p108
        %s251 = smul.u32 4, %s25
        %p252 = scmp.lt.s32.totalorder %s24, 3
        %s253 = scalar_select %p252, %s24, 3
        %p254 = scmp.lt.s32.totalorder %s251, 3
        %s255 = scalar_select %p254, %s251, 3
        %s256 = smul.addr %s253, 4
        %s257 = sadd.s32 %s255, %s256
        %s258 = smul.addr %s257, 8
        %s259 = scalar_lea.vmem %s4, %s258
        %p260 = pneg %p139
        %p261 = pneg %p136
        %p262 = pneg %p167
        %p263 = pneg %p164
        %s264 = smul.u32 4, %s25
        %p265 = scmp.lt.s32.totalorder %s24, 3
        %s266 = scalar_select %p265, %s24, 3
        %p267 = scmp.lt.s32.totalorder %s264, 3
        %s268 = scalar_select %p267, %s264, 3
        %s269 = smul.addr %s266, 4
        %s270 = sadd.s32 %s268, %s269
        %s271 = smul.addr %s270, 4
        %s272 = scalar_lea.vmem %s5, %s271
        %s273 = smul.u32 4, %s25
        %p274 = scmp.lt.s32.totalorder %s24, 3
        %s275 = scalar_select %p274, %s24, 3
        %p276 = scmp.lt.s32.totalorder %s273, 3
        %s277 = scalar_select %p276, %s273, 3
        %s278 = smul.addr %s275, 4
        %s279 = sadd.s32 %s277, %s278
        %s280 = smul.addr %s279, 8
        %s281 = scalar_lea.vmem %s4, %s280
        %s282 = smul.u32 4, %s25
        %s283 = smul.u32 4, %s25
        %p284 = scmp.lt.s32.totalorder %s24, 3
        %s285 = scalar_select %p284, %s24, 3
        %p286 = scmp.lt.s32.totalorder %s283, 3
        %s287 = scalar_select %p286, %s283, 3
        %s288 = smul.addr %s285, 4
        %s289 = sadd.s32 %s287, %s288
        %s290 = smul.addr %s289, 4
        %s291 = scalar_lea.vmem %s5, %s290
        %s292 = smul.u32 4, %s25
        %s293 = sld [smem:[#allocation6 + %s24]]
        %s294 = sld [smem:[#allocation2]]
        %s295 = smul.f32 %s293, %s294
        %s296 = sld [smem:[#allocation3]]
        %s297 = sld [smem:[#allocation4 + %s24]]
        %s298 = smul.f32 %s297, %s295
        %s299 = ssub.f32 %s296, %s298
        %v300 = vld [vmem:[%s281] sm:$0xff]
        %v301 = vld [vmem:[%s281 + $0x8] sm:$0xff]
        %v302 = vld [vmem:[%s281 + $0x10] sm:$0xff]
        %v303 = vld [vmem:[%s281 + $0x18] sm:$0xff]
        %v304 = vstv %s295
        %v305 = vmul.f32 %v300, %v304
        %v306 = vmul.f32 %v301, %v304
        %v307 = vmul.f32 %v302, %v304
        %v308 = vmul.f32 %v303, %v304
        %v309 = vstv %s299
        %v310 = vadd.f32 %v305, %v309
        %v311 = vadd.f32 %v306, %v309
        %v312 = vadd.f32 %v307, %v309
        %v313 = vadd.f32 %v308, %v309
        %v314 = vpack.c.bf16 %v310, %v310
        %v315 = vpack.c.bf16 %v311, %v311
        %v316 = vpack.c.bf16 %v312, %v312
        %v317 = vpack.c.bf16 %v313, %v313
        %v322 = vunpack.c.l.b16 %v314
        %v323 = vunpack.c.l.b16 %v315
        %v324 = vunpack.c.l.b16 %v316
        %v325 = vunpack.c.l.b16 %v317
        %v326 = vpack.c.b16 %v323, %v322
        %v327 = vpack.c.b16 %v325, %v324
        %330 = vst [vmem:[%s291] sm:$0xff] %v326
        %331 = vst [vmem:[%s291 + $0x8] sm:$0xff] %v327
        %s332 = smul.u32 4, %s25
        %p333 = scmp.lt.s32.totalorder %s24, 3
        %s334 = scalar_select %p333, %s24, 3
        %p335 = scmp.lt.s32.totalorder %s332, 3
        %s336 = scalar_select %p335, %s332, 3
        %s337 = smul.addr %s334, 4
        %s338 = sadd.s32 %s336, %s337
        %s339 = smul.addr %s338, 4
        %s340 = scalar_lea.vmem %s5, %s339
        // Predicated region
        $region49: #{transvfa_forward.5} parent=39 // pred_check
          %p341 = pneg %p164
        $region50: #{transvfa_forward.5} parent=39 // pred_check_branch
          %343 = sbr.rel (%p341) target = $region52
        $region51: #{transvfa_forward.5} parent=39 // pred_region
          %s344 = smul.u32 4, %s25
        $region52: #{transvfa_forward.5} parent=39 // pred_fallthru
          _
      $region40: #{transvfa_forward.5} parent=5 // pred_fallthru
        _
      %p345 = scmp.le.s32.totalorder 2, %s15
      // Predicated region
      $region53: #{transvfa_forward.5} parent=5 // pred_check
        %p346 = pneg %p345
      $region54: #{transvfa_forward.5} parent=5 // pred_check_branch
        %348 = sbr.rel (%p346) target = $region56
      $region55: #{transvfa_forward.5} parent=5 // pred_region
        %s349 = ssub.s32 %s15, 2
        // Predicated region
        $region57: #{transvfa_forward.5} parent=55 // pred_check
          %p350 = pneg %p170
        $region58: #{transvfa_forward.5} parent=55 // pred_check_branch
          %352 = sbr.rel (%p350) target = $region60
        $region59: #{transvfa_forward.5} parent=55 // pred_region
          %s353 = smul.u32 4, %s27
          %p354 = scmp.lt.s32.totalorder %s26, 3
          %s355 = scalar_select %p354, %s26, 3
          %p356 = scmp.lt.s32.totalorder %s353, 3
          %s357 = scalar_select %p356, %s353, 3
          %s358 = smul.addr %s355, 4
          %s359 = sadd.s32 %s357, %s358
          %s360 = smul.addr %s359, 4
          %s361 = scalar_lea.vmem %s5, %s360
        $region60: #{transvfa_forward.5} parent=55 // pred_fallthru
          _
      $region56: #{transvfa_forward.5} parent=5 // pred_fallthru
        _
    $region6: #{transvfa_forward.5} parent=1 // loop_footer
      %s19 = sadd.s32 1, %s15
    $region7: #{transvfa_forward.5} parent=1 // loop_footer_branch
      %14 = sbr.rel target = $region3
    $region8: #{transvfa_forward.5} parent=1 // loop_exit
      _
    %362 = vsyncpa [#allocation5], 1
    %s363 = scalar_lea.sflag [#allocation5], 1
    %364 = vsyncpa %s363, 1
    %365 = vsyncpa [#allocation7], 1

// kernel: transvfa_forward.4
$region0: #{transvfa_forward.4}
  #allocation0 [shape = 'u32[]', space=smem, size = 0x4, offset = 0x4, fixed_abs, tag = 'smem constant byte address 0x4 - core index']
  #allocation1 [shape = 'u32[144,128]{1,0:T(1,128)}', space=vmem, size = 0x12000, scoped, tag = 'internal scratch']
  %s0 = inlined_call_operand.vmem [shape: f32[4,8,512], index: 0, kind: input, shape index: {}]
  %s1 = inlined_call_operand.vmem [shape: f32[4,1,128], index: 1, kind: output, shape index: {}]
  %s2 = sld [smem:[#allocation0]]
  $region41: #{transvfa_forward.4} parent=0
    _
  %s4 = ssub.s32 1, %s2
  %s5 = scalar_select 0, %s4, %s2
  loop: start=0, step=1, limit=6
  $region2: #{transvfa_forward.4} parent=0 // loop_pre_header
    _
  $region3: #{transvfa_forward.4} parent=0 // loop_header
    %s7 = sphi 0, %s11
    %p8 = scmp.ge.s32.totalorder %s7, 6
    %s14 = sphi 0, %s26
    %s15 = sphi 0, %s22
    %s16 = sphi 0, %s14
    %s17 = sphi 0, %s15
    %s18 = sphi 0, %s16
    %s19 = sphi 0, %s17
    %s31 = sphi 0, %s33
    %s34 = sphi 0, %s31
    %s35 = sphi 0, %s34
    %s51 = sphi 0, %s35
    %s57 = sphi 0, %s59
    %s60 = sphi 0, %s57
    %s61 = sphi 0, %s60
    %s77 = sphi 0, %s61
  $region4: #{transvfa_forward.4} parent=0 // loop_header_branch
    %10 = sbr.rel (%p8) target = $region8
  $region5: #{transvfa_forward.4} parent=0 // loop_body
    %s12 = ssub.s32 %s7, 1
    %s13 = ssub.s32 %s7, 2
    %s20 = sadd.s32 1, %s15
    %p21 = scmp.ge.s32.totalorder %s20, 1
    %s22 = scalar_select %p21, 0, %s20
    %s23 = sadd.s32 1, %s14
    %s24 = scalar_select %p21, %s23, %s14
    %p25 = scmp.ge.s32.totalorder %s24, 4
    %s26 = scalar_select %p25, 0, %s24
    %s27 = ssub.s32 %s14, %s26
    %s28 = ssub.s32 %s15, %s22
    %s29 = sor.u32 %s27, %s28
    %p30 = scmp.eq.s32.totalorder %s29, 0
    %s32 = sadd.s32 %s31, 1
    %s33 = scalar_select %p30, %s31, %s32
    %p36 = pneg %p30
    %p37 = scmp.eq.s32.totalorder %s7, 3
    %p38 = por %p36, %p37
    %p39 = scmp.ne.s32.totalorder %s31, %s34
    %p40 = scmp.eq.s32.totalorder %s7, 0
    %p41 = por %p39, %p40
    %p42 = scmp.ne.s32.totalorder %s31, %s34
    %p43 = scmp.eq.s32.totalorder %s12, 3
    %p44 = por %p42, %p43
    %p45 = scmp.ne.s32.totalorder %s34, %s35
    %p46 = scmp.eq.s32.totalorder %s12, 0
    %p47 = por %p45, %p46
    %p48 = scmp.ne.s32.totalorder %s34, %s35
    %p49 = scmp.eq.s32.totalorder %s13, 3
    %p50 = por %p48, %p49
    %p52 = scmp.ne.s32.totalorder %s35, %s51
    %p53 = scmp.eq.s32.totalorder %s13, 0
    %p54 = por %p52, %p53
    %s55 = ssub.s32 %s14, %s26
    %p56 = scmp.eq.s32.totalorder %s55, 0
    %s58 = sadd.s32 %s57, 1
    %s59 = scalar_select %p56, %s57, %s58
    %p62 = pneg %p56
    %p63 = scmp.eq.s32.totalorder %s7, 3
    %p64 = por %p62, %p63
    %p65 = scmp.ne.s32.totalorder %s57, %s60
    %p66 = scmp.eq.s32.totalorder %s7, 0
    %p67 = por %p65, %p66
    %p68 = scmp.ne.s32.totalorder %s57, %s60
    %p69 = scmp.eq.s32.totalorder %s12, 3
    %p70 = por %p68, %p69
    %p71 = scmp.ne.s32.totalorder %s60, %s61
    %p72 = scmp.eq.s32.totalorder %s12, 0
    %p73 = por %p71, %p72
    %p74 = scmp.ne.s32.totalorder %s60, %s61
    %p75 = scmp.eq.s32.totalorder %s13, 3
    %p76 = por %p74, %p75
    %p78 = scmp.ne.s32.totalorder %s61, %s77
    %p79 = scmp.eq.s32.totalorder %s13, 0
    %p80 = por %p78, %p79
    %p81 = scmp.le.s32.totalorder 1, %s7
    %p82 = scmp.lt.s32.totalorder %s7, 5
    %p83 = pnand %p81, %p82
    %p84 = pneg %p83
    // Predicated region
    $region9: #{transvfa_forward.4} parent=5 // pred_check
      _
    $region10: #{transvfa_forward.4} parent=5 // pred_check_branch
      %86 = sbr.rel (%p83) target = $region12
    $region11: #{transvfa_forward.4} parent=5 // pred_region
      %s87 = ssub.s32 %s7, 1
    $region12: #{transvfa_forward.4} parent=5 // pred_fallthru
      _
    %p88 = scmp.lt.s32.totalorder %s7, 4
    // Predicated region
    $region13: #{transvfa_forward.4} parent=5 // pred_check
      %p89 = pneg %p88
    $region14: #{transvfa_forward.4} parent=5 // pred_check_branch
      %91 = sbr.rel (%p89) target = $region16
    $region15: #{transvfa_forward.4} parent=5 // pred_region
      // Predicated region
      $region17: #{transvfa_forward.4} parent=15 // pred_check
        %p92 = pneg %p41
      $region18: #{transvfa_forward.4} parent=15 // pred_check_branch
        %94 = sbr.rel (%p92) target = $region20
      $region19: #{transvfa_forward.4} parent=15 // pred_region
        %s95 = smul.u32 4, %s15
        %p96 = scmp.lt.s32.totalorder %s14, 3
        %s97 = scalar_select %p96, %s14, 3
        %p98 = scmp.lt.s32.totalorder %s95, 3
        %s99 = scalar_select %p98, %s95, 3
        %s100 = smul.addr %s97, 4
        %s101 = sadd.s32 %s99, %s100
        %s102 = smul.addr %s101, 8
        %s103 = scalar_lea.vmem %s0, %s102
        %s104 = smul.u32 4, %s15
      $region20: #{transvfa_forward.4} parent=15 // pred_fallthru
        _
    $region16: #{transvfa_forward.4} parent=5 // pred_fallthru
      _
    %p105 = scmp.le.s32.totalorder 1, %s7
    %p106 = scmp.lt.s32.totalorder %s7, 5
    %p107 = pnand %p105, %p106
    %p108 = pneg %p107
    // Predicated region
    $region21: #{transvfa_forward.4} parent=5 // pred_check
      _
    $region22: #{transvfa_forward.4} parent=5 // pred_check_branch
      %110 = sbr.rel (%p107) target = $region24
    $region23: #{transvfa_forward.4} parent=5 // pred_region
      %s111 = ssub.s32 %s7, 1
      %s112 = smul.u32 4, %s17
      %p113 = scmp.lt.s32.totalorder %s16, 3
      %s114 = scalar_select %p113, %s16, 3
      %p115 = scmp.lt.s32.totalorder %s112, 3
      %s116 = scalar_select %p115, %s112, 3
      %s117 = smul.addr %s114, 4
      %s118 = sadd.s32 %s116, %s117
      %s119 = smul.addr %s118, 8
      %s120 = scalar_lea.vmem %s0, %s119
      %p121 = pneg %p47
      %p122 = pneg %p44
      %p123 = pneg %p73
      %p124 = pneg %p70
      %p125 = scmp.lt.s32.totalorder %s16, 3
      %s126 = scalar_select %p125, %s16, 3
      %s127 = scalar_lea.vmem %s1, %s126
      %s128 = smul.u32 4, %s17
      %p129 = scmp.lt.s32.totalorder %s16, 3
      %s130 = scalar_select %p129, %s16, 3
      %p131 = scmp.lt.s32.totalorder %s128, 3
      %s132 = scalar_select %p131, %s128, 3
      %s133 = smul.addr %s130, 4
      %s134 = sadd.s32 %s132, %s133
      %s135 = smul.addr %s134, 8
      %s136 = scalar_lea.vmem %s0, %s135
      %s137 = smul.u32 4, %s17
      %p138 = scmp.lt.s32.totalorder %s16, 3
      %s139 = scalar_select %p138, %s16, 3
      %s140 = scalar_lea.vmem %s1, %s139
      %v141 = vld [vmem:[%s136] sm:$0xff]
      %v142 = vld [vmem:[%s136 + $0x8] sm:$0xff]
      %v143 = vld [vmem:[%s136 + $0x10] sm:$0xff]
      %v144 = vld [vmem:[%s136 + $0x18] sm:$0xff]
      %v145 = vadd.f32 %v141, %v142
      %v146 = vadd.f32 %v145, %v143
      %v147 = vadd.f32 %v146, %v144
      %148 = vadd.xlane.f32.xlu0 %v147
      %v149 = vpop.xlane.xlu0 %148
      %v150 = vrot.slane %v149, 4
      %v151 = vadd.f32 %v149, %v150
      %v152 = vrot.slane %v151, 2
      %v153 = vadd.f32 %v151, %v152
      %v154 = vrot.slane %v153, 1
      %v155 = vadd.f32 %v153, %v154
      %s156 = vtos %v155
      %v157 = vmul.f32 %v141, %v141
      %v158 = vmul.f32 %v142, %v142
      %v159 = vmul.f32 %v143, %v143
      %v160 = vmul.f32 %v144, %v144
      %v161 = vadd.f32 %v157, %v158
      %v162 = vadd.f32 %v161, %v159
      %v163 = vadd.f32 %v162, %v160
      %164 = vadd.xlane.f32.xlu0 %v163
      %v165 = vpop.xlane.xlu0 %164
      %v166 = vrot.slane %v165, 4
      %v167 = vadd.f32 %v165, %v166
      %v168 = vrot.slane %v167, 2
      %v169 = vadd.f32 %v167, %v168
      %v170 = vrot.slane %v169, 1
      %v171 = vadd.f32 %v169, %v170
      %s172 = vtos %v171
      %v173 = vlaneseq
      %v174 = vand.u32 %v173, 127
      %vm175 = vcmp.eq.s32.totalorder %v174, 0
      %v176 = vstv %s156
      %v177 = vsel %vm175, %v176, 0.0
      %vm178 = vcmp.eq.s32.totalorder %v174, 1
      %v179 = vstv %s172
      %v180 = vsel %vm178, %v179, 0.0
      %v181 = vadd.f32 %v177, %v180
      %p182 = scmp.eq.s32.totalorder %s17, 0
      // Predicated region
      $region25: #{transvfa_forward.4} parent=23 // pred_check
        %p183 = pneg %p182
      $region26: #{transvfa_forward.4} parent=23 // pred_check_branch
        %185 = sbr.rel (%p183) target = $region28
      $region27: #{transvfa_forward.4} parent=23 // pred_region
        %186 = vst [vmem:[%s140] sm:$0x1] 0.0
      $region28: #{transvfa_forward.4} parent=23 // pred_fallthru
        _
      %v187 = vld [vmem:[%s140] sm:$0x1]
      %v188 = vadd.f32 %v187, %v181
      %189 = vst [vmem:[%s140] sm:$0x1] %v188
      %p190 = scmp.lt.s32.totalorder %s16, 3
      %s191 = scalar_select %p190, %s16, 3
      %s192 = scalar_lea.vmem %s1, %s191
      // Predicated region
      $region29: #{transvfa_forward.4} parent=23 // pred_check
        %p193 = pneg %p70
      $region30: #{transvfa_forward.4} parent=23 // pred_check_branch
        %195 = sbr.rel (%p193) target = $region32
      $region31: #{transvfa_forward.4} parent=23 // pred_region
        _
      $region32: #{transvfa_forward.4} parent=23 // pred_fallthru
        _
    $region24: #{transvfa_forward.4} parent=5 // pred_fallthru
      _
    %p196 = scmp.le.s32.totalorder 2, %s7
    // Predicated region
    $region33: #{transvfa_forward.4} parent=5 // pred_check
      %p197 = pneg %p196
    $region34: #{transvfa_forward.4} parent=5 // pred_check_branch
      %199 = sbr.rel (%p197) target = $region36
    $region35: #{transvfa_forward.4} parent=5 // pred_region
      %s200 = ssub.s32 %s7, 2
      // Predicated region
      $region37: #{transvfa_forward.4} parent=35 // pred_check
        %p201 = pneg %p76
      $region38: #{transvfa_forward.4} parent=35 // pred_check_branch
        %203 = sbr.rel (%p201) target = $region40
      $region39: #{transvfa_forward.4} parent=35 // pred_region
        %p204 = scmp.lt.s32.totalorder %s18, 3
        %s205 = scalar_select %p204, %s18, 3
        %s206 = scalar_lea.vmem %s1, %s205
      $region40: #{transvfa_forward.4} parent=35 // pred_fallthru
        _
    $region36: #{transvfa_forward.4} parent=5 // pred_fallthru
      _
  $region6: #{transvfa_forward.4} parent=0 // loop_footer
    %s11 = sadd.s32 1, %s7
  $region7: #{transvfa_forward.4} parent=0 // loop_footer_branch
    %6 = sbr.rel target = $region3
  $region8: #{transvfa_forward.4} parent=0 // loop_exit
    _

// kernel: transvfa_forward.6
$region0: #{transvfa_forward.6}
  #allocation0 [shape = 'u32[]', space=smem, size = 0x4, offset = 0x4, fixed_abs, tag = 'smem constant byte address 0x4 - core index']
  #allocation1 [shape = 'u32[144,128]{1,0:T(1,128)}', space=vmem, size = 0x12000, scoped, tag = 'internal scratch']
  %s0 = inlined_call_operand.vmem [shape: bf16[32,512], index: 0, kind: input, shape index: {}]
  %s1 = inlined_call_operand.vmem [shape: bf16[512,64], index: 1, kind: input, shape index: {}]
  %s2 = inlined_call_operand.vmem [shape: f32[1,64], index: 2, kind: input, shape index: {}]
  %s3 = inlined_call_operand.vmem [shape: bf16[32,64], index: 3, kind: output, shape index: {}]
  %s4 = sld [smem:[#allocation0]]
  $region45: #{transvfa_forward.6} parent=0
    _
  %s6 = ssub.s32 1, %s4
  %s7 = scalar_select 0, %s6, %s4
  loop: start=0, step=1, limit=4
  $region2: #{transvfa_forward.6} parent=0 // loop_pre_header
    _
  $region3: #{transvfa_forward.6} parent=0 // loop_header
    %s9 = sphi 0, %s13
    %p10 = scmp.ge.s32.totalorder %s9, 4
    %s19 = sphi 0, %s21
    %s22 = sphi 0, %s19
    %s23 = sphi 0, %s22
    %s39 = sphi 0, %s23
    %s43 = sphi 0, %s43
    %s45 = sphi 0, %s43
    %s46 = sphi 0, %s45
    %s60 = sphi 0, %s46
    %s64 = sphi 0, %s64
    %s66 = sphi 0, %s64
    %s67 = sphi 0, %s66
    %s81 = sphi 0, %s67
    %s87 = sphi 0, %s89
    %s90 = sphi 0, %s87
    %s91 = sphi 0, %s90
    %s107 = sphi 0, %s91
  $region4: #{transvfa_forward.6} parent=0 // loop_header_branch
    %12 = sbr.rel (%p10) target = $region8
  $region5: #{transvfa_forward.6} parent=0 // loop_body
    %s14 = ssub.s32 %s9, 1
    %s15 = ssub.s32 %s9, 2
    %s16 = sadd.s32 %s9, 1
    %s17 = ssub.s32 %s9, %s16
    %p18 = scmp.eq.s32.totalorder %s17, 0
    %s20 = sadd.s32 %s19, 1
    %s21 = scalar_select %p18, %s19, %s20
    %p24 = pneg %p18
    %p25 = scmp.eq.s32.totalorder %s9, 1
    %p26 = por %p24, %p25
    %p27 = scmp.ne.s32.totalorder %s19, %s22
    %p28 = scmp.eq.s32.totalorder %s9, 0
    %p29 = por %p27, %p28
    %p30 = scmp.ne.s32.totalorder %s19, %s22
    %p31 = scmp.eq.s32.totalorder %s14, 1
    %p32 = por %p30, %p31
    %p33 = scmp.ne.s32.totalorder %s22, %s23
    %p34 = scmp.eq.s32.totalorder %s14, 0
    %p35 = por %p33, %p34
    %p36 = scmp.ne.s32.totalorder %s22, %s23
    %p37 = scmp.eq.s32.totalorder %s15, 1
    %p38 = por %p36, %p37
    %p40 = scmp.ne.s32.totalorder %s23, %s39
    %p41 = scmp.eq.s32.totalorder %s15, 0
    %p42 = por %p40, %p41
    %s44 = sadd.s32 %s43, 1
    %p47 = scmp.eq.s32.totalorder %s9, 1
    %p48 = scmp.ne.s32.totalorder %s43, %s45
    %p49 = scmp.eq.s32.totalorder %s9, 0
    %p50 = por %p48, %p49
    %p51 = scmp.ne.s32.totalorder %s43, %s45
    %p52 = scmp.eq.s32.totalorder %s14, 1
    %p53 = por %p51, %p52
    %p54 = scmp.ne.s32.totalorder %s45, %s46
    %p55 = scmp.eq.s32.totalorder %s14, 0
    %p56 = por %p54, %p55
    %p57 = scmp.ne.s32.totalorder %s45, %s46
    %p58 = scmp.eq.s32.totalorder %s15, 1
    %p59 = por %p57, %p58
    %p61 = scmp.ne.s32.totalorder %s46, %s60
    %p62 = scmp.eq.s32.totalorder %s15, 0
    %p63 = por %p61, %p62
    %s65 = sadd.s32 %s64, 1
    %p68 = scmp.eq.s32.totalorder %s9, 1
    %p69 = scmp.ne.s32.totalorder %s64, %s66
    %p70 = scmp.eq.s32.totalorder %s9, 0
    %p71 = por %p69, %p70
    %p72 = scmp.ne.s32.totalorder %s64, %s66
    %p73 = scmp.eq.s32.totalorder %s14, 1
    %p74 = por %p72, %p73
    %p75 = scmp.ne.s32.totalorder %s66, %s67
    %p76 = scmp.eq.s32.totalorder %s14, 0
    %p77 = por %p75, %p76
    %p78 = scmp.ne.s32.totalorder %s66, %s67
    %p79 = scmp.eq.s32.totalorder %s15, 1
    %p80 = por %p78, %p79
    %p82 = scmp.ne.s32.totalorder %s67, %s81
    %p83 = scmp.eq.s32.totalorder %s15, 0
    %p84 = por %p82, %p83
    %s85 = ssub.s32 %s9, %s16
    %p86 = scmp.eq.s32.totalorder %s85, 0
    %s88 = sadd.s32 %s87, 1
    %s89 = scalar_select %p86, %s87, %s88
    %p92 = pneg %p86
    %p93 = scmp.eq.s32.totalorder %s9, 1
    %p94 = por %p92, %p93
    %p95 = scmp.ne.s32.totalorder %s87, %s90
    %p96 = scmp.eq.s32.totalorder %s9, 0
    %p97 = por %p95, %p96
    %p98 = scmp.ne.s32.totalorder %s87, %s90
    %p99 = scmp.eq.s32.totalorder %s14, 1
    %p100 = por %p98, %p99
    %p101 = scmp.ne.s32.totalorder %s90, %s91
    %p102 = scmp.eq.s32.totalorder %s14, 0
    %p103 = por %p101, %p102
    %p104 = scmp.ne.s32.totalorder %s90, %s91
    %p105 = scmp.eq.s32.totalorder %s15, 1
    %p106 = por %p104, %p105
    %p108 = scmp.ne.s32.totalorder %s91, %s107
    %p109 = scmp.eq.s32.totalorder %s15, 0
    %p110 = por %p108, %p109
    %p111 = scmp.le.s32.totalorder 1, %s9
    %p112 = scmp.lt.s32.totalorder %s9, 3
    %p113 = pnand %p111, %p112
    %p114 = pneg %p113
    // Predicated region
    $region9: #{transvfa_forward.6} parent=5 // pred_check
      _
    $region10: #{transvfa_forward.6} parent=5 // pred_check_branch
      %116 = sbr.rel (%p113) target = $region12
    $region11: #{transvfa_forward.6} parent=5 // pred_region
      %s117 = ssub.s32 %s9, 1
      // Predicated region
      $region13: #{transvfa_forward.6} parent=11 // pred_check
        %p118 = pneg %p56
      $region14: #{transvfa_forward.6} parent=11 // pred_check_branch
        %120 = sbr.rel (%p118) target = $region16
      $region15: #{transvfa_forward.6} parent=11 // pred_region
        _
      $region16: #{transvfa_forward.6} parent=11 // pred_fallthru
        _
      // Predicated region
      $region17: #{transvfa_forward.6} parent=11 // pred_check
        %p121 = pneg %p77
      $region18: #{transvfa_forward.6} parent=11 // pred_check_branch
        %123 = sbr.rel (%p121) target = $region20
      $region19: #{transvfa_forward.6} parent=11 // pred_region
        _
      $region20: #{transvfa_forward.6} parent=11 // pred_fallthru
        _
    $region12: #{transvfa_forward.6} parent=5 // pred_fallthru
      _
    %p124 = scmp.lt.s32.totalorder %s9, 2
    // Predicated region
    $region21: #{transvfa_forward.6} parent=5 // pred_check
      %p125 = pneg %p124
    $region22: #{transvfa_forward.6} parent=5 // pred_check_branch
      %127 = sbr.rel (%p125) target = $region24
    $region23: #{transvfa_forward.6} parent=5 // pred_region
      // Predicated region
      $region25: #{transvfa_forward.6} parent=23 // pred_check
        %p128 = pneg %p29
      $region26: #{transvfa_forward.6} parent=23 // pred_check_branch
        %130 = sbr.rel (%p128) target = $region28
      $region27: #{transvfa_forward.6} parent=23 // pred_region
        %s131 = smul.u32 2, %s9
        %p132 = scmp.lt.s32.totalorder %s131, 3
        %s133 = scalar_select %p132, %s131, 3
        %s134 = smul.addr %s133, 4
        %s135 = smul.addr %s134, 4
        %s136 = scalar_lea.vmem %s0, %s135
        %s137 = smul.u32 2, %s9
      $region28: #{transvfa_forward.6} parent=23 // pred_fallthru
        _
    $region24: #{transvfa_forward.6} parent=5 // pred_fallthru
      _
    %p138 = scmp.le.s32.totalorder 1, %s9
    %p139 = scmp.lt.s32.totalorder %s9, 3
    %p140 = pnand %p138, %p139
    %p141 = pneg %p140
    // Predicated region
    $region29: #{transvfa_forward.6} parent=5 // pred_check
      _
    $region30: #{transvfa_forward.6} parent=5 // pred_check_branch
      %143 = sbr.rel (%p140) target = $region32
    $region31: #{transvfa_forward.6} parent=5 // pred_region
      %s144 = ssub.s32 %s9, 1
      %s145 = smul.u32 2, %s14
      %p146 = scmp.lt.s32.totalorder %s145, 3
      %s147 = scalar_select %p146, %s145, 3
      %s148 = smul.addr %s147, 4
      %s149 = smul.addr %s148, 4
      %s150 = scalar_lea.vmem %s0, %s149
      %p151 = pneg %p35
      %p152 = pneg %p32
      %p153 = pneg %p56
      %p154 = pneg %p53
      %p155 = pneg %p77
      %p156 = pneg %p74
      %p157 = pneg %p103
      %p158 = pneg %p100
      %s159 = smul.u32 2, %s14
      %p160 = scmp.lt.s32.totalorder %s159, 3
      %s161 = scalar_select %p160, %s159, 3
      %s162 = smul.addr %s161, 4
      %s163 = scalar_lea.vmem %s3, %s162
      %s164 = smul.u32 2, %s14
      %p165 = scmp.lt.s32.totalorder %s164, 3
      %s166 = scalar_select %p165, %s164, 3
      %s167 = smul.addr %s166, 4
      %s168 = smul.addr %s167, 4
      %s169 = scalar_lea.vmem %s0, %s168
      %s170 = smul.u32 2, %s14
      %s171 = smul.u32 2, %s14
      %p172 = scmp.lt.s32.totalorder %s171, 3
      %s173 = scalar_select %p172, %s171, 3
      %s174 = smul.addr %s173, 4
      %s175 = scalar_lea.vmem %s3, %s174
      %s176 = smul.u32 2, %s14
      %v178 = vld [vmem:[%s169] sm:$0xff]
      %v179 = vld [vmem:[%s169 + $0x8] sm:$0xff]
      %v180 = vld [vmem:[%s169 + $0x10] sm:$0xff]
      %v181 = vld [vmem:[%s169 + $0x18] sm:$0xff]
      %v182 = vld [vmem:[%s1] sm:$0xf]
      %v183 = vld [vmem:[%s1 + $0x4] sm:$0xf]
      %v184 = vld [vmem:[%s1 + $0x8] sm:$0xf]
      %v185 = vld [vmem:[%s1 + $0xc] sm:$0xf]
      %v186 = vld [vmem:[%s1 + $0x10] sm:$0xf]
      %v187 = vld [vmem:[%s1 + $0x14] sm:$0xf]
      %v188 = vld [vmem:[%s1 + $0x18] sm:$0xf]
      %v189 = vld [vmem:[%s1 + $0x1c] sm:$0xf]
      %v190 = vld [vmem:[%s1 + $0x20] sm:$0xf]
      %v191 = vld [vmem:[%s1 + $0x24] sm:$0xf]
      %v192 = vld [vmem:[%s1 + $0x28] sm:$0xf]
      %v193 = vld [vmem:[%s1 + $0x2c] sm:$0xf]
      %v194 = vld [vmem:[%s1 + $0x30] sm:$0xf]
      %v195 = vld [vmem:[%s1 + $0x34] sm:$0xf]
      %v196 = vld [vmem:[%s1 + $0x38] sm:$0xf]
      %v197 = vld [vmem:[%s1 + $0x3c] sm:$0xf]
      %v198 = vld [vmem:[%s1 + $0x40] sm:$0xf]
      %v199 = vld [vmem:[%s1 + $0x44] sm:$0xf]
      %v200 = vld [vmem:[%s1 + $0x48] sm:$0xf]
      %v201 = vld [vmem:[%s1 + $0x4c] sm:$0xf]
      %v202 = vld [vmem:[%s1 + $0x50] sm:$0xf]
      %v203 = vld [vmem:[%s1 + $0x54] sm:$0xf]
      %v204 = vld [vmem:[%s1 + $0x58] sm:$0xf]
      %v205 = vld [vmem:[%s1 + $0x5c] sm:$0xf]
      %v206 = vld [vmem:[%s1 + $0x60] sm:$0xf]
      %v207 = vld [vmem:[%s1 + $0x64] sm:$0xf]
      %v208 = vld [vmem:[%s1 + $0x68] sm:$0xf]
      %v209 = vld [vmem:[%s1 + $0x6c] sm:$0xf]
      %v210 = vld [vmem:[%s1 + $0x70] sm:$0xf]
      %v211 = vld [vmem:[%s1 + $0x74] sm:$0xf]
      %v212 = vld [vmem:[%s1 + $0x78] sm:$0xf]
      %v213 = vld [vmem:[%s1 + $0x7c] sm:$0xf]
      %v214 = vld [vmem:[%s1 + $0x80] sm:$0xf]
      %v215 = vld [vmem:[%s1 + $0x84] sm:$0xf]
      %v216 = vld [vmem:[%s1 + $0x88] sm:$0xf]
      %v217 = vld [vmem:[%s1 + $0x8c] sm:$0xf]
      %v218 = vld [vmem:[%s1 + $0x90] sm:$0xf]
      %v219 = vld [vmem:[%s1 + $0x94] sm:$0xf]
      %v220 = vld [vmem:[%s1 + $0x98] sm:$0xf]
      %v221 = vld [vmem:[%s1 + $0x9c] sm:$0xf]
      %v222 = vld [vmem:[%s1 + $0xa0] sm:$0xf]
      %v223 = vld [vmem:[%s1 + $0xa4] sm:$0xf]
      %v224 = vld [vmem:[%s1 + $0xa8] sm:$0xf]
      %v225 = vld [vmem:[%s1 + $0xac] sm:$0xf]
      %v226 = vld [vmem:[%s1 + $0xb0] sm:$0xf]
      %v227 = vld [vmem:[%s1 + $0xb4] sm:$0xf]
      %v228 = vld [vmem:[%s1 + $0xb8] sm:$0xf]
      %v229 = vld [vmem:[%s1 + $0xbc] sm:$0xf]
      %v230 = vld [vmem:[%s1 + $0xc0] sm:$0xf]
      %v231 = vld [vmem:[%s1 + $0xc4] sm:$0xf]
      %v232 = vld [vmem:[%s1 + $0xc8] sm:$0xf]
      %v233 = vld [vmem:[%s1 + $0xcc] sm:$0xf]
      %v234 = vld [vmem:[%s1 + $0xd0] sm:$0xf]
      %v235 = vld [vmem:[%s1 + $0xd4] sm:$0xf]
      %v236 = vld [vmem:[%s1 + $0xd8] sm:$0xf]
      %v237 = vld [vmem:[%s1 + $0xdc] sm:$0xf]
      %v238 = vld [vmem:[%s1 + $0xe0] sm:$0xf]
      %v239 = vld [vmem:[%s1 + $0xe4] sm:$0xf]
      %v240 = vld [vmem:[%s1 + $0xe8] sm:$0xf]
      %v241 = vld [vmem:[%s1 + $0xec] sm:$0xf]
      %v242 = vld [vmem:[%s1 + $0xf0] sm:$0xf]
      %v243 = vld [vmem:[%s1 + $0xf4] sm:$0xf]
      %v244 = vld [vmem:[%s1 + $0xf8] sm:$0xf]
      %v245 = vld [vmem:[%s1 + $0xfc] sm:$0xf]
      %v246 = vld [vmem:[%s2] sm:$0x1]
      %v248 = vlaneseq
      %v249 = vshrl.u32 %v248, 7
      %v250 = vsub.s32 0, %v249
      %v251 = vrot.slane %v246, %v250
      %v257 = vunpack.c.l.b16 %v178
      %v258 = vunpack.c.h.b16 %v178
      %v259 = vunpack.c.l.b16 %v179
      %v260 = vunpack.c.h.b16 %v179
      %v261 = vunpack.c.l.b16 %v180
      %v262 = vunpack.c.h.b16 %v180
      %v263 = vunpack.c.l.b16 %v181
      %v264 = vunpack.c.h.b16 %v181
      %v265 = vpack.c.b16 %v261, %v257
      %v266 = vpack.c.b16 %v262, %v258
      %v267 = vpack.c.b16 %v263, %v259
      %v268 = vpack.c.b16 %v264, %v260
      %v337 = vunpack.c.l.b16 %v182
      %v338 = vunpack.c.l.b16 %v183
      %v339 = vunpack.c.l.b16 %v184
      %v340 = vunpack.c.l.b16 %v185
      %v341 = vunpack.c.l.b16 %v186
      %v342 = vunpack.c.l.b16 %v187
      %v343 = vunpack.c.l.b16 %v188
      %v344 = vunpack.c.l.b16 %v189
      %v345 = vunpack.c.l.b16 %v190
      %v346 = vunpack.c.l.b16 %v191
      %v347 = vunpack.c.l.b16 %v192
      %v348 = vunpack.c.l.b16 %v193
      %v349 = vunpack.c.l.b16 %v194
      %v350 = vunpack.c.l.b16 %v195
      %v351 = vunpack.c.l.b16 %v196
      %v352 = vunpack.c.l.b16 %v197
      %v353 = vunpack.c.l.b16 %v198
      %v354 = vunpack.c.l.b16 %v199
      %v355 = vunpack.c.l.b16 %v200
      %v356 = vunpack.c.l.b16 %v201
      %v357 = vunpack.c.l.b16 %v202
      %v358 = vunpack.c.l.b16 %v203
      %v359 = vunpack.c.l.b16 %v204
      %v360 = vunpack.c.l.b16 %v205
      %v361 = vunpack.c.l.b16 %v206
      %v362 = vunpack.c.l.b16 %v207
      %v363 = vunpack.c.l.b16 %v208
      %v364 = vunpack.c.l.b16 %v209
      %v365 = vunpack.c.l.b16 %v210
      %v366 = vunpack.c.l.b16 %v211
      %v367 = vunpack.c.l.b16 %v212
      %v368 = vunpack.c.l.b16 %v213
      %v369 = vunpack.c.l.b16 %v214
      %v370 = vunpack.c.l.b16 %v215
      %v371 = vunpack.c.l.b16 %v216
      %v372 = vunpack.c.l.b16 %v217
      %v373 = vunpack.c.l.b16 %v218
      %v374 = vunpack.c.l.b16 %v219
      %v375 = vunpack.c.l.b16 %v220
      %v376 = vunpack.c.l.b16 %v221
      %v377 = vunpack.c.l.b16 %v222
      %v378 = vunpack.c.l.b16 %v223
      %v379 = vunpack.c.l.b16 %v224
      %v380 = vunpack.c.l.b16 %v225
      %v381 = vunpack.c.l.b16 %v226
      %v382 = vunpack.c.l.b16 %v227
      %v383 = vunpack.c.l.b16 %v228
      %v384 = vunpack.c.l.b16 %v229
      %v385 = vunpack.c.l.b16 %v230
      %v386 = vunpack.c.l.b16 %v231
      %v387 = vunpack.c.l.b16 %v232
      %v388 = vunpack.c.l.b16 %v233
      %v389 = vunpack.c.l.b16 %v234
      %v390 = vunpack.c.l.b16 %v235
      %v391 = vunpack.c.l.b16 %v236
      %v392 = vunpack.c.l.b16 %v237
      %v393 = vunpack.c.l.b16 %v238
      %v394 = vunpack.c.l.b16 %v239
      %v395 = vunpack.c.l.b16 %v240
      %v396 = vunpack.c.l.b16 %v241
      %v397 = vunpack.c.l.b16 %v242
      %v398 = vunpack.c.l.b16 %v243
      %v399 = vunpack.c.l.b16 %v244
      %v400 = vunpack.c.l.b16 %v245
      %v401 = vpack.c.b16 %v338, %v337
      %v402 = vpack.c.b16 %v340, %v339
      %v403 = vpack.c.b16 %v342, %v341
      %v404 = vpack.c.b16 %v344, %v343
      %v405 = vpack.c.b16 %v346, %v345
      %v406 = vpack.c.b16 %v348, %v347
      %v407 = vpack.c.b16 %v350, %v349
      %v408 = vpack.c.b16 %v352, %v351
      %v409 = vpack.c.b16 %v354, %v353
      %v410 = vpack.c.b16 %v356, %v355
      %v411 = vpack.c.b16 %v358, %v357
      %v412 = vpack.c.b16 %v360, %v359
      %v413 = vpack.c.b16 %v362, %v361
      %v414 = vpack.c.b16 %v364, %v363
      %v415 = vpack.c.b16 %v366, %v365
      %v416 = vpack.c.b16 %v368, %v367
      %v417 = vpack.c.b16 %v370, %v369
      %v418 = vpack.c.b16 %v372, %v371
      %v419 = vpack.c.b16 %v374, %v373
      %v420 = vpack.c.b16 %v376, %v375
      %v421 = vpack.c.b16 %v378, %v377
      %v422 = vpack.c.b16 %v380, %v379
      %v423 = vpack.c.b16 %v382, %v381
      %v424 = vpack.c.b16 %v384, %v383
      %v425 = vpack.c.b16 %v386, %v385
      %v426 = vpack.c.b16 %v388, %v387
      %v427 = vpack.c.b16 %v390, %v389
      %v428 = vpack.c.b16 %v392, %v391
      %v429 = vpack.c.b16 %v394, %v393
      %v430 = vpack.c.b16 %v396, %v395
      %v431 = vpack.c.b16 %v398, %v397
      %v432 = vpack.c.b16 %v400, %v399
      %465 = vmatprep.subr.bf16.mxu0 0
      %466 = vmatpush1.bf16.msra.mxu0 %v401
      %467 = vmatprep.subr.bf16.mxu0 0
      %468 = vmatpush1.bf16.msra.mxu0 %v402
      %469 = vmatprep.subr.bf16.mxu0 0
      %470 = vmatpush1.bf16.msra.mxu0 %v403
      %471 = vmatprep.subr.bf16.mxu0 0
      %472 = vmatpush1.bf16.msra.mxu0 %v404
      %473 = vmatprep.subr.bf16.mxu0 0
      %474 = vmatpush1.bf16.msra.mxu0 %v405
      %475 = vmatprep.subr.bf16.mxu0 0
      %476 = vmatpush1.bf16.msra.mxu0 %v406
      %477 = vmatprep.subr.bf16.mxu0 0
      %478 = vmatpush1.bf16.msra.mxu0 %v407
      %479 = vmatprep.subr.bf16.mxu0 0
      %480 = vmatpush1.bf16.msra.mxu0 %v408
      %481 = vmatprep.subr.bf16.mxu0 0
      %482 = vmatpush1.bf16.msra.mxu0 %v409
      %483 = vmatprep.subr.bf16.mxu0 0
      %484 = vmatpush1.bf16.msra.mxu0 %v410
      %485 = vmatprep.subr.bf16.mxu0 0
      %486 = vmatpush1.bf16.msra.mxu0 %v411
      %487 = vmatprep.subr.bf16.mxu0 0
      %488 = vmatpush1.bf16.msra.mxu0 %v412
      %489 = vmatprep.subr.bf16.mxu0 0
      %490 = vmatpush1.bf16.msra.mxu0 %v413
      %491 = vmatprep.subr.bf16.mxu0 0
      %492 = vmatpush1.bf16.msra.mxu0 %v414
      %493 = vmatprep.subr.bf16.mxu0 0
      %494 = vmatpush1.bf16.msra.mxu0 %v415
      %495 = vmatprep.subr.bf16.mxu0 0
      %496 = vmatpush1.bf16.msra.mxu0 %v416
      %497 = vmatprep.mubr.bf16.mxu0 %v266
      %498 = vmatmul.mubr.bf16.gmra.mrb[0].mxu0 %v265
      %v499 = vpop.f32.mrb[0].mxu0
      %v500 = vadd.f32 %v251, %v499
      %v501 = vpop.f32.mrb[0].mxu0
      %v502 = vpop.f32.mrb[0].mxu0
      %v503 = vadd.f32 %v251, %v502
      %v504 = vpop.f32.mrb[0].mxu0
      %505 = vdwg.mxu0
      %506 = vmatprep.subr.bf16.mxu0 0
      %507 = vmatpush1.bf16.msra.mxu0 %v417
      %508 = vmatprep.subr.bf16.mxu0 0
      %509 = vmatpush1.bf16.msra.mxu0 %v418
      %510 = vmatprep.subr.bf16.mxu0 0
      %511 = vmatpush1.bf16.msra.mxu0 %v419
      %512 = vmatprep.subr.bf16.mxu0 0
      %513 = vmatpush1.bf16.msra.mxu0 %v420
      %514 = vmatprep.subr.bf16.mxu0 0
      %515 = vmatpush1.bf16.msra.mxu0 %v421
      %516 = vmatprep.subr.bf16.mxu0 0
      %517 = vmatpush1.bf16.msra.mxu0 %v422
      %518 = vmatprep.subr.bf16.mxu0 0
      %519 = vmatpush1.bf16.msra.mxu0 %v423
      %520 = vmatprep.subr.bf16.mxu0 0
      %521 = vmatpush1.bf16.msra.mxu0 %v424
      %522 = vmatprep.subr.bf16.mxu0 0
      %523 = vmatpush1.bf16.msra.mxu0 %v425
      %524 = vmatprep.subr.bf16.mxu0 0
      %525 = vmatpush1.bf16.msra.mxu0 %v426
      %526 = vmatprep.subr.bf16.mxu0 0
      %527 = vmatpush1.bf16.msra.mxu0 %v427
      %528 = vmatprep.subr.bf16.mxu0 0
      %529 = vmatpush1.bf16.msra.mxu0 %v428
      %530 = vmatprep.subr.bf16.mxu0 0
      %531 = vmatpush1.bf16.msra.mxu0 %v429
      %532 = vmatprep.subr.bf16.mxu0 0
      %533 = vmatpush1.bf16.msra.mxu0 %v430
      %534 = vmatprep.subr.bf16.mxu0 0
      %535 = vmatpush1.bf16.msra.mxu0 %v431
      %536 = vmatprep.subr.bf16.mxu0 0
      %537 = vmatpush1.bf16.msra.mxu0 %v432
      %538 = vmatprep.mubr.bf16.mxu0 %v268
      %539 = vmatmul.mubr.bf16.gmra.mrb[0].mxu0 %v267
      %v540 = vpop.f32.mrb[0].mxu0
      %v541 = vadd.f32 %v500, %v540
      %v542 = vpop.f32.mrb[0].mxu0
      %v543 = vpop.f32.mrb[0].mxu0
      %v544 = vadd.f32 %v503, %v543
      %v545 = vpop.f32.mrb[0].mxu0
      %546 = vdwg.mxu0
      %v547 = vmax.f32 %v541, 0.0
      %v548 = vmax.f32 %v544, 0.0
      %v549 = vpack.c.bf16 %v548, %v547
      %v551 = vunpack.c.l.b16 %v549
      %v552 = vunpack.c.h.b16 %v549
      %v553 = vpack.c.b16 %v551, %v551
      %v554 = vpack.c.b16 %v552, %v552
      %vm557 = vcmask 519168
      %558 = vst.msk [vmem:[%s175] sm:$0xf] %vm557, %v553
      %559 = vst.msk [vmem:[%s175 + $0x4] sm:$0xf] %vm557, %v554
      %s560 = smul.u32 2, %s14
      %p561 = scmp.lt.s32.totalorder %s560, 3
      %s562 = scalar_select %p561, %s560, 3
      %s563 = smul.addr %s562, 4
      %s564 = scalar_lea.vmem %s3, %s563
      // Predicated region
      $region33: #{transvfa_forward.6} parent=31 // pred_check
        %p565 = pneg %p100
      $region34: #{transvfa_forward.6} parent=31 // pred_check_branch
        %567 = sbr.rel (%p565) target = $region36
      $region35: #{transvfa_forward.6} parent=31 // pred_region
        %s568 = smul.u32 2, %s14
      $region36: #{transvfa_forward.6} parent=31 // pred_fallthru
        _
    $region32: #{transvfa_forward.6} parent=5 // pred_fallthru
      _
    %p569 = scmp.le.s32.totalorder 2, %s9
    // Predicated region
    $region37: #{transvfa_forward.6} parent=5 // pred_check
      %p570 = pneg %p569
    $region38: #{transvfa_forward.6} parent=5 // pred_check_branch
      %572 = sbr.rel (%p570) target = $region40
    $region39: #{transvfa_forward.6} parent=5 // pred_region
      %s573 = ssub.s32 %s9, 2
      // Predicated region
      $region41: #{transvfa_forward.6} parent=39 // pred_check
        %p574 = pneg %p106
      $region42: #{transvfa_forward.6} parent=39 // pred_check_branch
        %576 = sbr.rel (%p574) target = $region44
      $region43: #{transvfa_forward.6} parent=39 // pred_region
        %s577 = smul.u32 2, %s15
        %p578 = scmp.lt.s32.totalorder %s577, 3
        %s579 = scalar_select %p578, %s577, 3
        %s580 = smul.addr %s579, 4
        %s581 = scalar_lea.vmem %s3, %s580
      $region44: #{transvfa_forward.6} parent=39 // pred_fallthru
        _
    $region40: #{transvfa_forward.6} parent=5 // pred_fallthru
      _
  $region6: #{transvfa_forward.6} parent=0 // loop_footer
    %s13 = sadd.s32 1, %s9
  $region7: #{transvfa_forward.6} parent=0 // loop_footer_branch
    %8 = sbr.rel target = $region3
  $region8: #{transvfa_forward.6} parent=0 // loop_exit
    _

// kernel: transvfa_forward.7
$region0: #{transvfa_forward.7}
  #allocation0 [shape = 'u32[]', space=smem, size = 0x4, offset = 0x4, fixed_abs, tag = 'smem constant byte address 0x4 - core index']
  #allocation1 [shape = 'u32[144,128]{1,0:T(1,128)}', space=vmem, size = 0x12000, scoped, tag = 'internal scratch']
  %s0 = inlined_call_operand.vmem [shape: bf16[16,128], index: 0, kind: input, shape index: {}]
  %s1 = inlined_call_operand.vmem [shape: bf16[128,3], index: 1, kind: input, shape index: {}]
  %s2 = inlined_call_operand.vmem [shape: f32[1,3], index: 2, kind: input, shape index: {}]
  %s3 = inlined_call_operand.vmem [shape: f32[16,3], index: 3, kind: output, shape index: {}]
  %s4 = sld [smem:[#allocation0]]
  $region22: #{transvfa_forward.7} parent=0
    _
  %s6 = ssub.s32 1, %s4
  %s7 = scalar_select 0, %s6, %s4
  // Predicated region
  $region2: #{transvfa_forward.7} parent=0 // pred_check
    _
  $region3: #{transvfa_forward.7} parent=0 // pred_check_branch
    %9 = sbr.rel (0) target = $region5
  $region4: #{transvfa_forward.7} parent=0 // pred_region
    _
  $region5: #{transvfa_forward.7} parent=0 // pred_fallthru
    _
  // Predicated region
  $region6: #{transvfa_forward.7} parent=0 // pred_check
    _
  $region7: #{transvfa_forward.7} parent=0 // pred_check_branch
    %11 = sbr.rel (0) target = $region9
  $region8: #{transvfa_forward.7} parent=0 // pred_region
    _
  $region9: #{transvfa_forward.7} parent=0 // pred_fallthru
    _
  // Predicated region
  $region10: #{transvfa_forward.7} parent=0 // pred_check
    _
  $region11: #{transvfa_forward.7} parent=0 // pred_check_branch
    %13 = sbr.rel (0) target = $region13
  $region12: #{transvfa_forward.7} parent=0 // pred_region
    _
  $region13: #{transvfa_forward.7} parent=0 // pred_fallthru
    _
  %v15 = vld [vmem:[%s0] sm:$0xf]
  %v16 = vld [vmem:[%s0 + $0x4] sm:$0xf]
  %v17 = vld [vmem:[%s1] sm:$0xf]
  %v18 = vld [vmem:[%s1 + $0x4] sm:$0xf]
  %v19 = vld [vmem:[%s1 + $0x8] sm:$0xf]
  %v20 = vld [vmem:[%s1 + $0xc] sm:$0xf]
  %v21 = vld [vmem:[%s1 + $0x10] sm:$0xf]
  %v22 = vld [vmem:[%s1 + $0x14] sm:$0xf]
  %v23 = vld [vmem:[%s1 + $0x18] sm:$0xf]
  %v24 = vld [vmem:[%s1 + $0x1c] sm:$0xf]
  %v25 = vld [vmem:[%s1 + $0x20] sm:$0xf]
  %v26 = vld [vmem:[%s1 + $0x24] sm:$0xf]
  %v27 = vld [vmem:[%s1 + $0x28] sm:$0xf]
  %v28 = vld [vmem:[%s1 + $0x2c] sm:$0xf]
  %v29 = vld [vmem:[%s1 + $0x30] sm:$0xf]
  %v30 = vld [vmem:[%s1 + $0x34] sm:$0xf]
  %v31 = vld [vmem:[%s1 + $0x38] sm:$0xf]
  %v32 = vld [vmem:[%s1 + $0x3c] sm:$0xf]
  %v33 = vld [vmem:[%s2] sm:$0x1]
  %v35 = vlaneseq
  %v36 = vshrl.u32 %v35, 7
  %v37 = vsub.s32 0, %v36
  %v38 = vrot.slane %v33, %v37
  %v42 = vunpack.c.l.b16 %v15
  %v43 = vunpack.c.l.b16 %v16
  %v44 = vpack.c.b16 %v43, %v42
  %v62 = vunpack.c.l.b16 %v17
  %v63 = vunpack.c.l.b16 %v18
  %v64 = vunpack.c.l.b16 %v19
  %v65 = vunpack.c.l.b16 %v20
  %v66 = vunpack.c.l.b16 %v21
  %v67 = vunpack.c.l.b16 %v22
  %v68 = vunpack.c.l.b16 %v23
  %v69 = vunpack.c.l.b16 %v24
  %v70 = vunpack.c.l.b16 %v25
  %v71 = vunpack.c.l.b16 %v26
  %v72 = vunpack.c.l.b16 %v27
  %v73 = vunpack.c.l.b16 %v28
  %v74 = vunpack.c.l.b16 %v29
  %v75 = vunpack.c.l.b16 %v30
  %v76 = vunpack.c.l.b16 %v31
  %v77 = vunpack.c.l.b16 %v32
  %v78 = vpack.c.b16 %v63, %v62
  %v79 = vpack.c.b16 %v65, %v64
  %v80 = vpack.c.b16 %v67, %v66
  %v81 = vpack.c.b16 %v69, %v68
  %v82 = vpack.c.b16 %v71, %v70
  %v83 = vpack.c.b16 %v73, %v72
  %v84 = vpack.c.b16 %v75, %v74
  %v85 = vpack.c.b16 %v77, %v76
  %94 = vmatprep.subr.bf16.mxu0 0
  %95 = vmatpush1.bf16.msra.mxu0 %v78
  %96 = vmatprep.subr.bf16.mxu0 0
  %97 = vmatpush1.bf16.msra.mxu0 %v79
  %98 = vmatprep.subr.bf16.mxu0 0
  %99 = vmatpush1.bf16.msra.mxu0 %v80
  %100 = vmatprep.subr.bf16.mxu0 0
  %101 = vmatpush1.bf16.msra.mxu0 %v81
  %102 = vmatprep.subr.bf16.mxu0 0
  %103 = vmatpush1.bf16.msra.mxu0 %v82
  %104 = vmatprep.subr.bf16.mxu0 0
  %105 = vmatpush1.bf16.msra.mxu0 %v83
  %106 = vmatprep.subr.bf16.mxu0 0
  %107 = vmatpush1.bf16.msra.mxu0 %v84
  %108 = vmatprep.subr.bf16.mxu0 0
  %109 = vmatpush1.bf16.msra.mxu0 %v85
  %110 = vmatprep.subr.bf16.mxu0 0
  %111 = vmatpush1.bf16.msra.mxu0 0
  %112 = vmatprep.subr.bf16.mxu0 0
  %113 = vmatpush1.bf16.msra.mxu0 0
  %114 = vmatprep.subr.bf16.mxu0 0
  %115 = vmatpush1.bf16.msra.mxu0 0
  %116 = vmatprep.subr.bf16.mxu0 0
  %117 = vmatpush1.bf16.msra.mxu0 0
  %118 = vmatprep.subr.bf16.mxu0 0
  %119 = vmatpush1.bf16.msra.mxu0 0
  %120 = vmatprep.subr.bf16.mxu0 0
  %121 = vmatpush1.bf16.msra.mxu0 0
  %122 = vmatprep.subr.bf16.mxu0 0
  %123 = vmatpush1.bf16.msra.mxu0 0
  %124 = vmatprep.subr.bf16.mxu0 0
  %125 = vmatpush1.bf16.msra.mxu0 0
  %126 = vmatprep.mubr.bf16.mxu0 0
  %127 = vmatmul.mubr.bf16.gmra.mrb[0].mxu0 %v44
  %v128 = vpop.f32.mrb[0].mxu0
  %v129 = vadd.f32 %v38, %v128
  %v130 = vpop.f32.mrb[0].mxu0
  %v131 = vpop.f32.mrb[0].mxu0
  %v132 = vadd.f32 %v38, %v131
  %v133 = vpop.f32.mrb[0].mxu0
  %134 = vdwg.mxu0
  %vm135 = vcmask 23552
  %136 = vst.msk [vmem:[%s3] sm:$0xff] %vm135, %v129
  %137 = vst.msk [vmem:[%s3 + $0x8] sm:$0xff] %vm135, %v132
  // Predicated region
  $region14: #{transvfa_forward.7} parent=0 // pred_check
    _
  $region15: #{transvfa_forward.7} parent=0 // pred_check_branch
    %139 = sbr.rel (0) target = $region17
  $region16: #{transvfa_forward.7} parent=0 // pred_region
    _
  $region17: #{transvfa_forward.7} parent=0 // pred_fallthru
    _
  // Predicated region
  $region18: #{transvfa_forward.7} parent=0 // pred_check
    _
  $region19: #{transvfa_forward.7} parent=0 // pred_check_branch
    %141 = sbr.rel (0) target = $region21
  $region20: #{transvfa_forward.7} parent=0 // pred_region
    _
  $region21: #{transvfa_forward.7} parent=0 // pred_fallthru
    _

</llo_original>
